<compile_context>
chip_gen: v7x
topology: tpu7x:2x2x1
jax: 0.10.0
libtpu: 0.0.40
codegen_flags: <defaults>
</compile_context>

<pallas_src>
import functools
import math
import numpy as np
import jax
import jax.numpy as jnp
from jax.experimental import pallas as pl
from jax.experimental.pallas import tpu as pltpu


def energy3d_kernel(z_ref, wl_ref, bl_ref,
                    m1_ref, b1_ref, g1_ref, be1_ref, s1_ref, s1t_ref,
                    m2_ref, b2_ref, g2_ref, be2_ref, s2_ref, s2t_ref,
                    m3_ref, b3_ref, s3_ref, s3t_ref,
                    vn_ref, we_ref, bee_ref,
                    x_ref, eng_ref, norm_ref,
                    *, n_total, tile_n, l1, l2, dx, eps):
    f32, bf16 = jnp.float32, jnp.bfloat16

    # Rows of this batch tile that are real (rest is zero padding).
    i = pl.program_id(0)
    n_valid = jnp.minimum(n_total - i * tile_n, tile_n)
    nv_f = n_valid.astype(f32)
    row_ids = jax.lax.broadcasted_iota(jnp.int32, (tile_n, 1), 0)
    row_mask = (row_ids < n_valid).astype(f32)                       # (TN, 1)

    z = z_ref[...]                                                   # (TN, Dp) f32

    # ---- F_universal.recon_block: Linear(latent -> L0*C), lane-padded to 128 ----
    h = jnp.dot(z.astype(bf16), wl_ref[...],
                preferred_element_type=f32) + bl_ref[...]

    def deconv_relu_bn(x, m_ref, b_ref, g_ref, be_ref, s_ref, st_ref, length):
        # ConvTranspose1d as one dense bf16 matmul + bias, then ReLU.
        y = jnp.dot(x.astype(bf16), m_ref[...],
                    preferred_element_type=f32) + b_ref[...]
        y = jnp.maximum(y, 0.0)
        # Train-mode BatchNorm1d: biased stats over (valid batch rows, length).
        ym = y * row_mask
        red = jnp.concatenate(
            [jnp.sum(ym, axis=0, keepdims=True),
             jnp.sum(ym * y, axis=0, keepdims=True)], axis=0)        # (2, L*C)
        stats = jnp.dot(red, s_ref[...], preferred_element_type=f32)  # (2, C)
        cnt = nv_f * float(length)
        mean = stats[0:1, :] / cnt
        var = stats[1:2, :] / cnt - mean * mean
        inv = jax.lax.rsqrt(var + eps)
        scale = inv * g_ref[...]                                     # folded affine
        shift = be_ref[...] - mean * scale
        bc = jnp.dot(jnp.concatenate([scale, shift], axis=0), st_ref[...],
                     preferred_element_type=f32)                     # (2, L*C)
        return y * bc[0:1, :] + bc[1:2, :]

    h = deconv_relu_bn(h, m1_ref, b1_ref, g1_ref, be1_ref, s1_ref, s1t_ref, l1)
    h = deconv_relu_bn(h, m2_ref, b2_ref, g2_ref, be2_ref, s2_ref, s2t_ref, l2)

    # ---- third deconv (no ReLU/BN) + sigmoid + per-channel length normalization ----
    y = jnp.dot(h.astype(bf16), m3_ref[...],
                preferred_element_type=f32) + b3_ref[...]
    y = pl.reciprocal(1.0 + jnp.exp(-y), approx=True)                # sigmoid
    ch_norm = jnp.dot(y, s3_ref[...], preferred_element_type=f32) * dx   # (TN, Cout)
    inv_norm = pl.reciprocal(ch_norm, approx=True)
    x = y * jnp.dot(inv_norm, s3t_ref[...], preferred_element_type=f32)  # (TN, L3*Cout)
    x_ref[...] = x

    # ---- Energy3D head ----
    dx3 = dx ** 3
    # <x, v>*dx^3 and total-norm*dx^3 in one matmul against [v_flat | ones].
    red = jnp.dot(x, vn_ref[...], preferred_element_type=f32) * dx3      # (TN, 2)
    # TODO(synk): eng_1 stand-in (linear head on z); F_universal's energy branch is
    # not defined in the provided spec.
    eng1 = jnp.sum(z * we_ref[...], axis=1, keepdims=True) + bee_ref[...]   # (TN, 1)
    eng_ref[...] = eng1 + red[:, 0:1]
    norm_ref[...] = red[:, 1:2]


# ----------------------------- host-side glue -----------------------------

def _round_up(x, m):
    return (x + m - 1) // m * m


def _convtranspose_matrix(W, l_in, stride, padding):
    """Dense matrix for ConvTranspose1d in (L, C)-flat layout."""
    W = np.asarray(W, np.float32)
    c_in, c_out, K = W.shape
    l_out = (l_in - 1) * stride - 2 * padding + K
    M = np.zeros((l_in * c_in, l_out * c_out), np.float32)
    for li in range(l_in):
        for k in range(K):
            lo = li * stride - padding + k
            if 0 <= lo < l_out:
                M[li * c_in:(li + 1) * c_in, lo * c_out:(lo + 1) * c_out] += W[:, :, k]
    return M, l_out


def _selector(length, channels):
    return np.tile(np.eye(channels, dtype=np.float32), (length, 1))   # (L*C, C)


def _tile_channel(v, length):
    return np.tile(np.asarray(v, np.float32), length)[None, :]        # (1, L*C)


def _const_spec(arr):
    nd = arr.ndim
    return pl.BlockSpec(arr.shape, lambda i, _nd=nd: (0,) * _nd)      # resident weight


def energy3d_forward(z, v, params, cfg, *, tile_n=None):
    C, Cout = cfg["hidden_channels"], cfg["output_channels"]
    pad, stride = cfg["padding"], 2
    L0 = cfg["output_size"] // cfg["pooling_size"] ** 3
    dx = cfg["dx"]
    D = cfg["latent_dimension"]
    N = int(z.shape[0])

    # Linear: permute PyTorch (C, L0)-ordered output columns to (L0, C)-flat layout,
    # then zero-pad latent (K) and output (lane) dims up to 128.
    perm = (np.arange(C)[None, :] * L0 + np.arange(L0)[:, None]).reshape(-1)
    wl = np.asarray(params["Wl"], np.float32).T[:, perm]               # (D, L0*C)
    bl = np.asarray(params["bl"], np.float32)[perm][None, :]           # (1, L0*C)
    d_pad = _round_up(D, 128)
    l0c_pad = _round_up(L0 * C, 128)
    wl = np.pad(wl, ((0, d_pad - D), (0, l0c_pad - L0 * C)))
    bl = np.pad(bl, ((0, 0), (0, l0c_pad - L0 * C)))

    M1, L1 = _convtranspose_matrix(params["W1"], L0, stride, pad)
    M2, L2 = _convtranspose_matrix(params["W2"], L1, stride, pad)
    M3, L3 = _convtranspose_matrix(params["W3"], L2, stride, pad)
    assert L3 == cfg["output_size"]
    M1 = np.pad(M1, ((0, l0c_pad - L0 * C), (0, 0)))                   # align with padded h

    b1 = _tile_channel(params["b1"], L1)
    b2 = _tile_channel(params["b2"], L2)
    b3 = _tile_channel(params["b3"], L3)
    g1 = np.asarray(params["g1"], np.float32)[None, :]
    be1 = np.asarray(params["be1"], np.float32)[None, :]
    g2 = np.asarray(params["g2"], np.float32)[None, :]
    be2 = np.asarray(params["be2"], np.float32)[None, :]

    S1, S2, S3 = _selector(L1, C), _selector(L2, C), _selector(L3, Cout)

    # Energy3D extras: external potential v flattened to the (L, C) lane layout and
    # stacked with a ones column so <x,v> and the total norm share one matmul;
    # plus the stand-in linear energy head.
    lc3 = L3 * Cout
    v_cl = np.asarray(v, np.float32).reshape(Cout, L3)
    vn = np.ones((lc3, 2), np.float32)
    vn[:, 0] = v_cl.T.reshape(-1)
    we = np.pad(np.asarray(params["we"], np.float32)[None, :], ((0, 0), (0, d_pad - D)))
    bee = np.asarray(params["be_e"], np.float32).reshape(1, 1)

    # Batch tiling (pad to >=8 sublanes; cap at 128 which is fine on v5e/v6e/v7x).
    if tile_n is None:
        tile_n = 128 if N >= 128 else _round_up(max(N, 1), 8)
    n_pad = _round_up(N, tile_n)
    z_pad = np.zeros((n_pad, d_pad), np.float32)
    z_pad[:N, :D] = np.asarray(z, np.float32)

    to_bf16 = lambda a: jnp.asarray(a, jnp.bfloat16)
    to_f32 = lambda a: jnp.asarray(a, jnp.float32)

    inputs = (to_f32(z_pad), to_bf16(wl), to_f32(bl),
              to_bf16(M1), to_f32(b1), to_f32(g1), to_f32(be1),
              to_f32(S1), to_f32(S1.T.copy()),
              to_bf16(M2), to_f32(b2), to_f32(g2), to_f32(be2),
              to_f32(S2), to_f32(S2.T.copy()),
              to_bf16(M3), to_f32(b3), to_f32(S3), to_f32(S3.T.copy()),
              to_f32(vn), to_f32(we), to_f32(bee))

    grid = (n_pad // tile_n,)
    in_specs = [pl.BlockSpec((tile_n, d_pad), lambda i: (i, 0))]
    in_specs += [_const_spec(a) for a in inputs[1:]]
    out_specs = (pl.BlockSpec((tile_n, lc3), lambda i: (i, 0)),
                 pl.BlockSpec((tile_n, 1), lambda i: (i, 0)),
                 pl.BlockSpec((tile_n, 1), lambda i: (i, 0)))
    out_shape = (jax.ShapeDtypeStruct((n_pad, lc3), jnp.float32),
                 jax.ShapeDtypeStruct((n_pad, 1), jnp.float32),
                 jax.ShapeDtypeStruct((n_pad, 1), jnp.float32))

    flops = 2 * n_pad * (d_pad * l0c_pad + l0c_pad * (L1 * C)
                         + (L1 * C) * (L2 * C) + (L2 * C) * lc3
                         + Cout * lc3 + 2 * lc3)
    bytes_accessed = int(sum(a.size * a.dtype.itemsize for a in inputs)
                         + n_pad * (lc3 + 2) * 4)
    cost = pl.CostEstimate(flops=int(flops),
                           transcendentals=int(2 * n_pad * lc3),
                           bytes_accessed=bytes_accessed)

    kernel = functools.partial(energy3d_kernel, n_total=N, tile_n=tile_n,
                               l1=L1, l2=L2, dx=dx, eps=1e-5)
    x_flat, eng, norm = pl.pallas_call(
        kernel,
        grid=grid,
        in_specs=in_specs,
        out_specs=out_specs,
        out_shape=out_shape,
        cost_estimate=cost,
        compiler_params=pltpu.CompilerParams(
            dimension_semantics=("parallel",)),
    )(*inputs)

    # (N, L3*Cout) in (L, C)-flat layout -> (a, i=Cout, j, k) like the PyTorch module.
    side = int(round(math.sqrt(L3)))
    assert side * side == L3
    x = (x_flat[:N].reshape(N, L3, Cout).transpose(0, 2, 1)
         .reshape(N, Cout, side, side))
    return eng[:N, 0], norm[:N, 0], x


# ------------------- independent float64 numpy reference -------------------

def reference_forward(z, v, params, cfg):
    z = np.asarray(z, np.float64)
    v = np.asarray(v, np.float64)
    C, Cout = cfg["hidden_channels"], cfg["output_channels"]
    pad, stride = cfg["padding"], 2
    L0 = cfg["output_size"] // cfg["pooling_size"] ** 3
    dx = cfg["dx"]

    def p(name):
        return np.asarray(params[name], np.float64)

    def conv_transpose1d(x, W, b):
        n, cin, L = x.shape
        _, cout, k = W.shape
        lo_len = (L - 1) * stride - 2 * pad + k
        y = np.zeros((n, cout, lo_len))
        for li in range(L):
            for kk in range(k):
                lo = li * stride - pad + kk
                if 0 <= lo < lo_len:
                    y[:, :, lo] += x[:, :, li] @ W[:, :, kk]
        return y + b[None, :, None]

    def bn(x, g, be, eps=1e-5):
        mean = x.mean(axis=(0, 2), keepdims=True)
        var = ((x - mean) ** 2).mean(axis=(0, 2), keepdims=True)
        return (x - mean) / np.sqrt(var + eps) * g[None, :, None] + be[None, :, None]

    h = z @ p("Wl").T + p("bl")
    h = h.reshape(-1, C, L0)
    h = bn(np.maximum(conv_transpose1d(h, p("W1"), p("b1")), 0.0), p("g1"), p("be1"))
    h = bn(np.maximum(conv_transpose1d(h, p("W2"), p("b2")), 0.0), p("g2"), p("be2"))
    y = conv_transpose1d(h, p("W3"), p("b3"))
    y = 1.0 / (1.0 + np.exp(-y))
    ch_norm = y.sum(axis=2) * dx
    x = y / ch_norm[:, :, None]                       # F_universal output x

    N, _, L3 = x.shape
    side = int(round(np.sqrt(L3)))
    x4 = x.reshape(N, Cout, side, side)
    eng1 = z @ p("we") + p("be_e")                    # stand-in energy head
    eng2 = np.einsum('aijk,ijk->a', x4, v) * dx ** 3
    norm = x4.sum(axis=(1, 2, 3)) * dx ** 3
    return eng1 + eng2, norm, x4


if __name__ == "__main__":
    cfg = dict(latent_dimension=32, hidden_channels=8, output_channels=4,
               output_size=64, pooling_size=2, padding=1, kernel_size=3, dx=0.1)
    N = 2
    D, C, Cout = cfg["latent_dimension"], cfg["hidden_channels"], cfg["output_channels"]
    K = cfg["kernel_size"] + 1                # ConvTranspose1d kernel_size = kernel_size + 1
    L0 = cfg["output_size"] // cfg["pooling_size"] ** 3   # 64 / 8 = 8

    key = jax.random.PRNGKey(0)
    kz, kv, kp = jax.random.split(key, 3)
    z = jax.random.normal(kz, (N, D), jnp.float32)
    v = jax.random.normal(kv, (Cout, 8, 8), jnp.float32)   # external potential (i, j, k)

    ks = jax.random.split(kp, 14)
    s = 0.2
    params = {
        "Wl": jax.random.normal(ks[0], (C * L0, D), jnp.float32) * s,
        "bl": jax.random.normal(ks[1], (C * L0,), jnp.float32) * s,
        "W1": jax.random.normal(ks[2], (C, C, K), jnp.float32) * s,
        "b1": jax.random.normal(ks[3], (C,), jnp.float32) * s,
        "g1": 1.0 + 0.1 * jax.random.normal(ks[4], (C,), jnp.float32),
        "be1": 0.1 * jax.random.normal(ks[5], (C,), jnp.float32),
        "W2": jax.random.normal(ks[6], (C, C, K), jnp.float32) * s,
        "b2": jax.random.normal(ks[7], (C,), jnp.float32) * s,
        "g2": 1.0 + 0.1 * jax.random.normal(ks[8], (C,), jnp.float32),
        "be2": 0.1 * jax.random.normal(ks[9], (C,), jnp.float32),
        "W3": jax.random.normal(ks[10], (C, Cout, K), jnp.float32) * s,
        "b3": jax.random.normal(ks[11], (Cout,), jnp.float32) * s,
        "we": jax.random.normal(ks[12], (D,), jnp.float32) * s,    # stand-in eng_1 head
        "be_e": jax.random.normal(ks[13], (), jnp.float32) * s,
    }

    eng, norm, x = energy3d_forward(z, v, params, cfg)
    eng, norm, x = jax.block_until_ready((eng, norm, x))
    assert x.shape == (N, Cout, 8, 8)
    assert eng.shape == (N,) and norm.shape == (N,)

    np_params = {k: np.asarray(val) for k, val in params.items()}
    ref_eng, ref_norm, ref_x = reference_forward(np.asarray(z), np.asarray(v),
                                                 np_params, cfg)

    def check(a, b, name):
        a = np.asarray(a, np.float64)
        if not np.allclose(a, b, rtol=2e-2, atol=1e-2):
            err = float(np.max(np.abs(a - b)))
            raise AssertionError(f"{name} mismatch vs reference, max abs err = {err}")

    check(x, ref_x, "x")
    check(eng, ref_eng, "eng")
    check(norm, ref_norm, "norm")
    print("KERNEL_OK")
</pallas_src>

<mosaic_0001>
module attributes {stable_mosaic.version = 11 : i64} {
  func.func @energy3d_kernel(%arg0: i32, %arg1: memref<8x128xf32, #tpu.memory_space<vmem>>, %arg2: memref<128x128xbf16, #tpu.memory_space<vmem>>, %arg3: memref<1x128xf32, #tpu.memory_space<vmem>>, %arg4: memref<128x128xbf16, #tpu.memory_space<vmem>>, %arg5: memref<1x128xf32, #tpu.memory_space<vmem>>, %arg6: memref<1x8xf32, #tpu.memory_space<vmem>>, %arg7: memref<1x8xf32, #tpu.memory_space<vmem>>, %arg8: memref<128x8xf32, #tpu.memory_space<vmem>>, %arg9: memref<8x128xf32, #tpu.memory_space<vmem>>, %arg10: memref<128x256xbf16, #tpu.memory_space<vmem>>, %arg11: memref<1x256xf32, #tpu.memory_space<vmem>>, %arg12: memref<1x8xf32, #tpu.memory_space<vmem>>, %arg13: memref<1x8xf32, #tpu.memory_space<vmem>>, %arg14: memref<256x8xf32, #tpu.memory_space<vmem>>, %arg15: memref<8x256xf32, #tpu.memory_space<vmem>>, %arg16: memref<256x256xbf16, #tpu.memory_space<vmem>>, %arg17: memref<1x256xf32, #tpu.memory_space<vmem>>, %arg18: memref<256x4xf32, #tpu.memory_space<vmem>>, %arg19: memref<4x256xf32, #tpu.memory_space<vmem>>, %arg20: memref<256x2xf32, #tpu.memory_space<vmem>>, %arg21: memref<1x128xf32, #tpu.memory_space<vmem>>, %arg22: memref<1x1xf32, #tpu.memory_space<vmem>>, %arg23: memref<8x256xf32, #tpu.memory_space<vmem>>, %arg24: memref<8x1xf32, #tpu.memory_space<vmem>>, %arg25: memref<8x1xf32, #tpu.memory_space<vmem>>) attributes {dimension_semantics = [#tpu.dimension_semantics<parallel>], iteration_bounds = array<i64: 1>, scalar_prefetch = 0 : i64, scratch_operands = 0 : i64, tpu.core_type = #tpu.core_type<tc>, window_params = [{transform_indices = @transform_0, window_bounds = array<i64: 8, 128>}, {pipeline_mode = #tpu.pipeline_mode<synchronous>, transform_indices = @transform_1, window_bounds = array<i64: 128, 128>}, {pipeline_mode = #tpu.pipeline_mode<synchronous>, transform_indices = @transform_2, window_bounds = array<i64: 1, 128>}, {pipeline_mode = #tpu.pipeline_mode<synchronous>, transform_indices = @transform_3, window_bounds = array<i64: 128, 128>}, {pipeline_mode = #tpu.pipeline_mode<synchronous>, transform_indices = @transform_4, window_bounds = array<i64: 1, 128>}, {pipeline_mode = #tpu.pipeline_mode<synchronous>, transform_indices = @transform_5, window_bounds = array<i64: 1, 8>}, {pipeline_mode = #tpu.pipeline_mode<synchronous>, transform_indices = @transform_6, window_bounds = array<i64: 1, 8>}, {pipeline_mode = #tpu.pipeline_mode<synchronous>, transform_indices = @transform_7, window_bounds = array<i64: 128, 8>}, {pipeline_mode = #tpu.pipeline_mode<synchronous>, transform_indices = @transform_8, window_bounds = array<i64: 8, 128>}, {pipeline_mode = #tpu.pipeline_mode<synchronous>, transform_indices = @transform_9, window_bounds = array<i64: 128, 256>}, {pipeline_mode = #tpu.pipeline_mode<synchronous>, transform_indices = @transform_10, window_bounds = array<i64: 1, 256>}, {pipeline_mode = #tpu.pipeline_mode<synchronous>, transform_indices = @transform_11, window_bounds = array<i64: 1, 8>}, {pipeline_mode = #tpu.pipeline_mode<synchronous>, transform_indices = @transform_12, window_bounds = array<i64: 1, 8>}, {pipeline_mode = #tpu.pipeline_mode<synchronous>, transform_indices = @transform_13, window_bounds = array<i64: 256, 8>}, {pipeline_mode = #tpu.pipeline_mode<synchronous>, transform_indices = @transform_14, window_bounds = array<i64: 8, 256>}, {pipeline_mode = #tpu.pipeline_mode<synchronous>, transform_indices = @transform_15, window_bounds = array<i64: 256, 256>}, {pipeline_mode = #tpu.pipeline_mode<synchronous>, transform_indices = @transform_16, window_bounds = array<i64: 1, 256>}, {pipeline_mode = #tpu.pipeline_mode<synchronous>, transform_indices = @transform_17, window_bounds = array<i64: 256, 4>}, {pipeline_mode = #tpu.pipeline_mode<synchronous>, transform_indices = @transform_18, window_bounds = array<i64: 4, 256>}, {pipeline_mode = #tpu.pipeline_mode<synchronous>, transform_indices = @transform_19, window_bounds = array<i64: 256, 2>}, {pipeline_mode = #tpu.pipeline_mode<synchronous>, transform_indices = @transform_20, window_bounds = array<i64: 1, 128>}, {pipeline_mode = #tpu.pipeline_mode<synchronous>, transform_indices = @transform_21, window_bounds = array<i64: 1, 1>}, {transform_indices = @transform_22, window_bounds = array<i64: 8, 256>}, {transform_indices = @transform_23, window_bounds = array<i64: 8, 1>}, {transform_indices = @transform_24, window_bounds = array<i64: 8, 1>}]} {
    %c8_i32 = arith.constant 8 : i32
    %0 = arith.muli %arg0, %c8_i32 : i32
    %c2_i32 = arith.constant 2 : i32
    %1 = arith.subi %c2_i32, %0 : i32
    %c8_i32_0 = arith.constant 8 : i32
    %2 = arith.minsi %1, %c8_i32_0 : i32
    %3 = arith.sitofp %2 : i32 to f32
    %4 = tpu.iota {dimensions = array<i32: 0>} : vector<8x1xi32>
    %5 = vector.broadcast %2 : i32 to vector<8x1xi32>
    %6 = arith.cmpi slt, %4, %5 : vector<8x1xi32>
    %7 = arith.extui %6 : vector<8x1xi1> to vector<8x1xi32>
    %8 = arith.sitofp %7 : vector<8x1xi32> to vector<8x1xf32>
    %c0 = arith.constant 0 : index
    %c0_1 = arith.constant 0 : index
    %9 = vector.load %arg1[%c0, %c0_1] : memref<8x128xf32, #tpu.memory_space<vmem>>, vector<8x128xf32>
    %10 = arith.truncf %9 : vector<8x128xf32> to vector<8x128xbf16>
    %c0_2 = arith.constant 0 : index
    %c0_3 = arith.constant 0 : index
    %11 = vector.load %arg2[%c0_2, %c0_3] : memref<128x128xbf16, #tpu.memory_space<vmem>>, vector<128x128xbf16>
    %cst = arith.constant dense<0.000000e+00> : vector<8x128xf32>
    %12 = tpu.matmul %10, %11, %cst {dimension_numbers = #tpu.dot_dimension_numbers<[1], [0], [0], [1], [0, 0, 1, 1], [], []>} : vector<8x128xbf16>, vector<128x128xbf16>, vector<8x128xf32> -> vector<8x128xf32>
    %c0_4 = arith.constant 0 : index
    %c0_5 = arith.constant 0 : index
    %13 = vector.load %arg3[%c0_4, %c0_5] : memref<1x128xf32, #tpu.memory_space<vmem>>, vector<1x128xf32>
    %14 = vector.broadcast %13 : vector<1x128xf32> to vector<8x128xf32>
    %15 = arith.addf %12, %14 : vector<8x128xf32>
    %16 = arith.truncf %15 : vector<8x128xf32> to vector<8x128xbf16>
    %c0_6 = arith.constant 0 : index
    %c0_7 = arith.constant 0 : index
    %17 = vector.load %arg4[%c0_6, %c0_7] : memref<128x128xbf16, #tpu.memory_space<vmem>>, vector<128x128xbf16>
    %cst_8 = arith.constant dense<0.000000e+00> : vector<8x128xf32>
    %18 = tpu.matmul %16, %17, %cst_8 {dimension_numbers = #tpu.dot_dimension_numbers<[1], [0], [0], [1], [0, 0, 1, 1], [], []>} : vector<8x128xbf16>, vector<128x128xbf16>, vector<8x128xf32> -> vector<8x128xf32>
    %c0_9 = arith.constant 0 : index
    %c0_10 = arith.constant 0 : index
    %19 = vector.load %arg5[%c0_9, %c0_10] : memref<1x128xf32, #tpu.memory_space<vmem>>, vector<1x128xf32>
    %20 = vector.broadcast %19 : vector<1x128xf32> to vector<8x128xf32>
    %21 = arith.addf %18, %20 : vector<8x128xf32>
    %cst_11 = arith.constant 0.000000e+00 : f32
    %22 = vector.broadcast %cst_11 : f32 to vector<8x128xf32>
    %23 = arith.maximumf %21, %22 : vector<8x128xf32>
    %24 = vector.broadcast %8 : vector<8x1xf32> to vector<8x128xf32>
    %25 = arith.mulf %23, %24 : vector<8x128xf32>
    %cst_12 = arith.constant dense<0.000000e+00> : vector<128xf32>
    %26 = vector.multi_reduction <add>, %25, %cst_12 [0] : vector<8x128xf32> to vector<128xf32>
    %27 = vector.shape_cast %26 : vector<128xf32> to vector<1x128xf32>
    %28 = arith.mulf %25, %23 : vector<8x128xf32>
    %cst_13 = arith.constant dense<0.000000e+00> : vector<128xf32>
    %29 = vector.multi_reduction <add>, %28, %cst_13 [0] : vector<8x128xf32> to vector<128xf32>
    %30 = vector.shape_cast %29 : vector<128xf32> to vector<1x128xf32>
    %31 = tpu.concatenate %27, %30 in 0 : vector<1x128xf32>, vector<1x128xf32> -> vector<2x128xf32>
    %c0_14 = arith.constant 0 : index
    %c0_15 = arith.constant 0 : index
    %32 = vector.load %arg8[%c0_14, %c0_15] : memref<128x8xf32, #tpu.memory_space<vmem>>, vector<128x8xf32>
    %cst_16 = arith.constant dense<0.000000e+00> : vector<2x8xf32>
    %33 = tpu.matmul %31, %32, %cst_16 {dimension_numbers = #tpu.dot_dimension_numbers<[1], [0], [0], [1], [0, 0, 1, 1], [], []>} : vector<2x128xf32>, vector<128x8xf32>, vector<2x8xf32> -> vector<2x8xf32>
    %cst_17 = arith.constant 1.600000e+01 : f32
    %34 = arith.mulf %3, %cst_17 : f32
    %35 = vector.extract_strided_slice %33 {offsets = [0, 0], sizes = [1, 8], strides = [1, 1]} : vector<2x8xf32> to vector<1x8xf32>
    %36 = vector.broadcast %34 : f32 to vector<1x8xf32>
    %37 = arith.divf %35, %36 : vector<1x8xf32>
    %38 = vector.extract_strided_slice %33 {offsets = [1, 0], sizes = [1, 8], strides = [1, 1]} : vector<2x8xf32> to vector<1x8xf32>
    %39 = vector.broadcast %34 : f32 to vector<1x8xf32>
    %40 = arith.divf %38, %39 : vector<1x8xf32>
    %41 = arith.mulf %37, %37 : vector<1x8xf32>
    %42 = arith.subf %40, %41 : vector<1x8xf32>
    %cst_18 = arith.constant 9.99999974E-6 : f32
    %43 = vector.broadcast %cst_18 : f32 to vector<1x8xf32>
    %44 = arith.addf %42, %43 : vector<1x8xf32>
    %45 = math.rsqrt %44 : vector<1x8xf32>
    %c0_19 = arith.constant 0 : index
    %c0_20 = arith.constant 0 : index
    %46 = vector.load %arg6[%c0_19, %c0_20] : memref<1x8xf32, #tpu.memory_space<vmem>>, vector<1x8xf32>
    %47 = arith.mulf %45, %46 : vector<1x8xf32>
    %c0_21 = arith.constant 0 : index
    %c0_22 = arith.constant 0 : index
    %48 = vector.load %arg7[%c0_21, %c0_22] : memref<1x8xf32, #tpu.memory_space<vmem>>, vector<1x8xf32>
    %49 = arith.mulf %37, %47 : vector<1x8xf32>
    %50 = arith.subf %48, %49 : vector<1x8xf32>
    %51 = tpu.concatenate %47, %50 in 0 : vector<1x8xf32>, vector<1x8xf32> -> vector<2x8xf32>
    %c0_23 = arith.constant 0 : index
    %c0_24 = arith.constant 0 : index
    %52 = vector.load %arg9[%c0_23, %c0_24] : memref<8x128xf32, #tpu.memory_space<vmem>>, vector<8x128xf32>
    %cst_25 = arith.constant dense<0.000000e+00> : vector<2x128xf32>
    %53 = tpu.matmul %51, %52, %cst_25 {dimension_numbers = #tpu.dot_dimension_numbers<[1], [0], [0], [1], [0, 0, 1, 1], [], []>} : vector<2x8xf32>, vector<8x128xf32>, vector<2x128xf32> -> vector<2x128xf32>
    %54 = vector.extract_strided_slice %53 {offsets = [0, 0], sizes = [1, 128], strides = [1, 1]} : vector<2x128xf32> to vector<1x128xf32>
    %55 = vector.broadcast %54 : vector<1x128xf32> to vector<8x128xf32>
    %56 = arith.mulf %23, %55 : vector<8x128xf32>
    %57 = vector.extract_strided_slice %53 {offsets = [1, 0], sizes = [1, 128], strides = [1, 1]} : vector<2x128xf32> to vector<1x128xf32>
    %58 = vector.broadcast %57 : vector<1x128xf32> to vector<8x128xf32>
    %59 = arith.addf %56, %58 : vector<8x128xf32>
    %60 = arith.truncf %59 : vector<8x128xf32> to vector<8x128xbf16>
    %c0_26 = arith.constant 0 : index
    %c0_27 = arith.constant 0 : index
    %61 = vector.load %arg10[%c0_26, %c0_27] : memref<128x256xbf16, #tpu.memory_space<vmem>>, vector<128x256xbf16>
    %cst_28 = arith.constant dense<0.000000e+00> : vector<8x256xf32>
    %62 = tpu.matmul %60, %61, %cst_28 {dimension_numbers = #tpu.dot_dimension_numbers<[1], [0], [0], [1], [0, 0, 1, 1], [], []>} : vector<8x128xbf16>, vector<128x256xbf16>, vector<8x256xf32> -> vector<8x256xf32>
    %c0_29 = arith.constant 0 : index
    %c0_30 = arith.constant 0 : index
    %63 = vector.load %arg11[%c0_29, %c0_30] : memref<1x256xf32, #tpu.memory_space<vmem>>, vector<1x256xf32>
    %64 = vector.broadcast %63 : vector<1x256xf32> to vector<8x256xf32>
    %65 = arith.addf %62, %64 : vector<8x256xf32>
    %cst_31 = arith.constant 0.000000e+00 : f32
    %66 = vector.broadcast %cst_31 : f32 to vector<8x256xf32>
    %67 = arith.maximumf %65, %66 : vector<8x256xf32>
    %68 = vector.broadcast %8 : vector<8x1xf32> to vector<8x256xf32>
    %69 = arith.mulf %67, %68 : vector<8x256xf32>
    %cst_32 = arith.constant dense<0.000000e+00> : vector<256xf32>
    %70 = vector.multi_reduction <add>, %69, %cst_32 [0] : vector<8x256xf32> to vector<256xf32>
    %71 = vector.shape_cast %70 : vector<256xf32> to vector<1x256xf32>
    %72 = arith.mulf %69, %67 : vector<8x256xf32>
    %cst_33 = arith.constant dense<0.000000e+00> : vector<256xf32>
    %73 = vector.multi_reduction <add>, %72, %cst_33 [0] : vector<8x256xf32> to vector<256xf32>
    %74 = vector.shape_cast %73 : vector<256xf32> to vector<1x256xf32>
    %75 = tpu.concatenate %71, %74 in 0 : vector<1x256xf32>, vector<1x256xf32> -> vector<2x256xf32>
    %c0_34 = arith.constant 0 : index
    %c0_35 = arith.constant 0 : index
    %76 = vector.load %arg14[%c0_34, %c0_35] : memref<256x8xf32, #tpu.memory_space<vmem>>, vector<256x8xf32>
    %cst_36 = arith.constant dense<0.000000e+00> : vector<2x8xf32>
    %77 = tpu.matmul %75, %76, %cst_36 {dimension_numbers = #tpu.dot_dimension_numbers<[1], [0], [0], [1], [0, 0, 1, 1], [], []>} : vector<2x256xf32>, vector<256x8xf32>, vector<2x8xf32> -> vector<2x8xf32>
    %cst_37 = arith.constant 3.200000e+01 : f32
    %78 = arith.mulf %3, %cst_37 : f32
    %79 = vector.extract_strided_slice %77 {offsets = [0, 0], sizes = [1, 8], strides = [1, 1]} : vector<2x8xf32> to vector<1x8xf32>
    %80 = vector.broadcast %78 : f32 to vector<1x8xf32>
    %81 = arith.divf %79, %80 : vector<1x8xf32>
    %82 = vector.extract_strided_slice %77 {offsets = [1, 0], sizes = [1, 8], strides = [1, 1]} : vector<2x8xf32> to vector<1x8xf32>
    %83 = vector.broadcast %78 : f32 to vector<1x8xf32>
    %84 = arith.divf %82, %83 : vector<1x8xf32>
    %85 = arith.mulf %81, %81 : vector<1x8xf32>
    %86 = arith.subf %84, %85 : vector<1x8xf32>
    %cst_38 = arith.constant 9.99999974E-6 : f32
    %87 = vector.broadcast %cst_38 : f32 to vector<1x8xf32>
    %88 = arith.addf %86, %87 : vector<1x8xf32>
    %89 = math.rsqrt %88 : vector<1x8xf32>
    %c0_39 = arith.constant 0 : index
    %c0_40 = arith.constant 0 : index
    %90 = vector.load %arg12[%c0_39, %c0_40] : memref<1x8xf32, #tpu.memory_space<vmem>>, vector<1x8xf32>
    %91 = arith.mulf %89, %90 : vector<1x8xf32>
    %c0_41 = arith.constant 0 : index
    %c0_42 = arith.constant 0 : index
    %92 = vector.load %arg13[%c0_41, %c0_42] : memref<1x8xf32, #tpu.memory_space<vmem>>, vector<1x8xf32>
    %93 = arith.mulf %81, %91 : vector<1x8xf32>
    %94 = arith.subf %92, %93 : vector<1x8xf32>
    %95 = tpu.concatenate %91, %94 in 0 : vector<1x8xf32>, vector<1x8xf32> -> vector<2x8xf32>
    %c0_43 = arith.constant 0 : index
    %c0_44 = arith.constant 0 : index
    %96 = vector.load %arg15[%c0_43, %c0_44] : memref<8x256xf32, #tpu.memory_space<vmem>>, vector<8x256xf32>
    %cst_45 = arith.constant dense<0.000000e+00> : vector<2x256xf32>
    %97 = tpu.matmul %95, %96, %cst_45 {dimension_numbers = #tpu.dot_dimension_numbers<[1], [0], [0], [1], [0, 0, 1, 1], [], []>} : vector<2x8xf32>, vector<8x256xf32>, vector<2x256xf32> -> vector<2x256xf32>
    %98 = vector.extract_strided_slice %97 {offsets = [0, 0], sizes = [1, 256], strides = [1, 1]} : vector<2x256xf32> to vector<1x256xf32>
    %99 = vector.broadcast %98 : vector<1x256xf32> to vector<8x256xf32>
    %100 = arith.mulf %67, %99 : vector<8x256xf32>
    %101 = vector.extract_strided_slice %97 {offsets = [1, 0], sizes = [1, 256], strides = [1, 1]} : vector<2x256xf32> to vector<1x256xf32>
    %102 = vector.broadcast %101 : vector<1x256xf32> to vector<8x256xf32>
    %103 = arith.addf %100, %102 : vector<8x256xf32>
    %104 = arith.truncf %103 : vector<8x256xf32> to vector<8x256xbf16>
    %c0_46 = arith.constant 0 : index
    %c0_47 = arith.constant 0 : index
    %105 = vector.load %arg16[%c0_46, %c0_47] : memref<256x256xbf16, #tpu.memory_space<vmem>>, vector<256x256xbf16>
    %cst_48 = arith.constant dense<0.000000e+00> : vector<8x256xf32>
    %106 = tpu.matmul %104, %105, %cst_48 {dimension_numbers = #tpu.dot_dimension_numbers<[1], [0], [0], [1], [0, 0, 1, 1], [], []>} : vector<8x256xbf16>, vector<256x256xbf16>, vector<8x256xf32> -> vector<8x256xf32>
    %c0_49 = arith.constant 0 : index
    %c0_50 = arith.constant 0 : index
    %107 = vector.load %arg17[%c0_49, %c0_50] : memref<1x256xf32, #tpu.memory_space<vmem>>, vector<1x256xf32>
    %108 = vector.broadcast %107 : vector<1x256xf32> to vector<8x256xf32>
    %109 = arith.addf %106, %108 : vector<8x256xf32>
    %cst_51 = arith.constant 0.000000e+00 : f32
    %110 = vector.broadcast %cst_51 : f32 to vector<8x256xf32>
    %111 = arith.subf %110, %109 : vector<8x256xf32>
    %112 = math.exp %111 : vector<8x256xf32>
    %cst_52 = arith.constant 1.000000e+00 : f32
    %113 = vector.broadcast %cst_52 : f32 to vector<8x256xf32>
    %114 = arith.addf %113, %112 : vector<8x256xf32>
    %115 = tpu.reciprocal %114 {approx = true} : vector<8x256xf32> -> vector<8x256xf32>
    %c0_53 = arith.constant 0 : index
    %c0_54 = arith.constant 0 : index
    %116 = vector.load %arg18[%c0_53, %c0_54] : memref<256x4xf32, #tpu.memory_space<vmem>>, vector<256x4xf32>
    %cst_55 = arith.constant dense<0.000000e+00> : vector<8x4xf32>
    %117 = tpu.matmul %115, %116, %cst_55 {dimension_numbers = #tpu.dot_dimension_numbers<[1], [0], [0], [1], [0, 0, 1, 1], [], []>} : vector<8x256xf32>, vector<256x4xf32>, vector<8x4xf32> -> vector<8x4xf32>
    %cst_56 = arith.constant 1.000000e-01 : f32
    %118 = vector.broadcast %cst_56 : f32 to vector<8x4xf32>
    %119 = arith.mulf %117, %118 : vector<8x4xf32>
    %120 = tpu.reciprocal %119 {approx = true} : vector<8x4xf32> -> vector<8x4xf32>
    %c0_57 = arith.constant 0 : index
    %c0_58 = arith.constant 0 : index
    %121 = vector.load %arg19[%c0_57, %c0_58] : memref<4x256xf32, #tpu.memory_space<vmem>>, vector<4x256xf32>
    %cst_59 = arith.constant dense<0.000000e+00> : vector<8x256xf32>
    %122 = tpu.matmul %120, %121, %cst_59 {dimension_numbers = #tpu.dot_dimension_numbers<[1], [0], [0], [1], [0, 0, 1, 1], [], []>} : vector<8x4xf32>, vector<4x256xf32>, vector<8x256xf32> -> vector<8x256xf32>
    %123 = arith.mulf %115, %122 : vector<8x256xf32>
    %c0_60 = arith.constant 0 : index
    %c0_61 = arith.constant 0 : index
    %124 = vector.load %arg23[%c0_60, %c0_61] : memref<8x256xf32, #tpu.memory_space<vmem>>, vector<8x256xf32>
    tpu.vector_store %arg23[%c0_60, %c0_61], %123 {strides = array<i32>} : memref<8x256xf32, #tpu.memory_space<vmem>>, vector<8x256xf32>,
    %c0_62 = arith.constant 0 : index
    %c0_63 = arith.constant 0 : index
    %125 = vector.load %arg20[%c0_62, %c0_63] : memref<256x2xf32, #tpu.memory_space<vmem>>, vector<256x2xf32>
    %cst_64 = arith.constant dense<0.000000e+00> : vector<8x2xf32>
    %126 = tpu.matmul %123, %125, %cst_64 {dimension_numbers = #tpu.dot_dimension_numbers<[1], [0], [0], [1], [0, 0, 1, 1], [], []>} : vector<8x256xf32>, vector<256x2xf32>, vector<8x2xf32> -> vector<8x2xf32>
    %cst_65 = arith.constant 1.000000e-03 : f32
    %127 = vector.broadcast %cst_65 : f32 to vector<8x2xf32>
    %128 = arith.mulf %126, %127 : vector<8x2xf32>
    %c0_66 = arith.constant 0 : index
    %c0_67 = arith.constant 0 : index
    %129 = vector.load %arg21[%c0_66, %c0_67] : memref<1x128xf32, #tpu.memory_space<vmem>>, vector<1x128xf32>
    %130 = vector.broadcast %129 : vector<1x128xf32> to vector<8x128xf32>
    %131 = arith.mulf %9, %130 : vector<8x128xf32>
    %cst_68 = arith.constant dense<0.000000e+00> : vector<8xf32>
    %132 = vector.multi_reduction <add>, %131, %cst_68 [1] : vector<8x128xf32> to vector<8xf32>
    %133 = vector.shape_cast %132 : vector<8xf32> to vector<8x1xf32>
    %c0_69 = arith.constant 0 : index
    %c0_70 = arith.constant 0 : index
    %134 = vector.load %arg22[%c0_69, %c0_70] : memref<1x1xf32, #tpu.memory_space<vmem>>, vector<1x1xf32>
    %135 = vector.broadcast %134 : vector<1x1xf32> to vector<8x1xf32>
    %136 = arith.addf %133, %135 : vector<8x1xf32>
    %137 = vector.extract_strided_slice %128 {offsets = [0, 0], sizes = [8, 1], strides = [1, 1]} : vector<8x2xf32> to vector<8x1xf32>
    %138 = arith.addf %136, %137 : vector<8x1xf32>
    %c0_71 = arith.constant 0 : index
    %c0_72 = arith.constant 0 : index
    %139 = vector.load %arg24[%c0_71, %c0_72] : memref<8x1xf32, #tpu.memory_space<vmem>>, vector<8x1xf32>
    tpu.vector_store %arg24[%c0_71, %c0_72], %138 {strides = array<i32>} : memref<8x1xf32, #tpu.memory_space<vmem>>, vector<8x1xf32>,
    %140 = vector.extract_strided_slice %128 {offsets = [0, 1], sizes = [8, 1], strides = [1, 1]} : vector<8x2xf32> to vector<8x1xf32>
    %c0_73 = arith.constant 0 : index
    %c0_74 = arith.constant 0 : index
    %141 = vector.load %arg25[%c0_73, %c0_74] : memref<8x1xf32, #tpu.memory_space<vmem>>, vector<8x1xf32>
    tpu.vector_store %arg25[%c0_73, %c0_74], %140 {strides = array<i32>} : memref<8x1xf32, #tpu.memory_space<vmem>>, vector<8x1xf32>,
    return
  }
  func.func @transform_0(%arg0: i32) -> (i32, i32) {
    %c0_i32 = arith.constant 0 : i32
    %c0_i32_0 = arith.constant 0 : i32
    return %arg0, %c0_i32 : i32, i32
  }
  func.func @transform_1(%arg0: i32) -> (i32, i32) {
    %c0_i32 = arith.constant 0 : i32
    %c0_i32_0 = arith.constant 0 : i32
    %c0_i32_1 = arith.constant 0 : i32
    return %c0_i32, %c0_i32_0 : i32, i32
  }
  func.func @transform_2(%arg0: i32) -> (i32, i32) {
    %c0_i32 = arith.constant 0 : i32
    %c0_i32_0 = arith.constant 0 : i32
    %c0_i32_1 = arith.constant 0 : i32
    return %c0_i32, %c0_i32_0 : i32, i32
  }
  func.func @transform_3(%arg0: i32) -> (i32, i32) {
    %c0_i32 = arith.constant 0 : i32
    %c0_i32_0 = arith.constant 0 : i32
    %c0_i32_1 = arith.constant 0 : i32
    return %c0_i32, %c0_i32_0 : i32, i32
  }
  func.func @transform_4(%arg0: i32) -> (i32, i32) {
    %c0_i32 = arith.constant 0 : i32
    %c0_i32_0 = arith.constant 0 : i32
    %c0_i32_1 = arith.constant 0 : i32
    return %c0_i32, %c0_i32_0 : i32, i32
  }
  func.func @transform_5(%arg0: i32) -> (i32, i32) {
    %c0_i32 = arith.constant 0 : i32
    %c0_i32_0 = arith.constant 0 : i32
    %c0_i32_1 = arith.constant 0 : i32
    return %c0_i32, %c0_i32_0 : i32, i32
  }
  func.func @transform_6(%arg0: i32) -> (i32, i32) {
    %c0_i32 = arith.constant 0 : i32
    %c0_i32_0 = arith.constant 0 : i32
    %c0_i32_1 = arith.constant 0 : i32
    return %c0_i32, %c0_i32_0 : i32, i32
  }
  func.func @transform_7(%arg0: i32) -> (i32, i32) {
    %c0_i32 = arith.constant 0 : i32
    %c0_i32_0 = arith.constant 0 : i32
    %c0_i32_1 = arith.constant 0 : i32
    return %c0_i32, %c0_i32_0 : i32, i32
  }
  func.func @transform_8(%arg0: i32) -> (i32, i32) {
    %c0_i32 = arith.constant 0 : i32
    %c0_i32_0 = arith.constant 0 : i32
    %c0_i32_1 = arith.constant 0 : i32
    return %c0_i32, %c0_i32_0 : i32, i32
  }
  func.func @transform_9(%arg0: i32) -> (i32, i32) {
    %c0_i32 = arith.constant 0 : i32
    %c0_i32_0 = arith.constant 0 : i32
    %c0_i32_1 = arith.constant 0 : i32
    return %c0_i32, %c0_i32_0 : i32, i32
  }
  func.func @transform_10(%arg0: i32) -> (i32, i32) {
    %c0_i32 = arith.constant 0 : i32
    %c0_i32_0 = arith.constant 0 : i32
    %c0_i32_1 = arith.constant 0 : i32
    return %c0_i32, %c0_i32_0 : i32, i32
  }
  func.func @transform_11(%arg0: i32) -> (i32, i32) {
    %c0_i32 = arith.constant 0 : i32
    %c0_i32_0 = arith.constant 0 : i32
    %c0_i32_1 = arith.constant 0 : i32
    return %c0_i32, %c0_i32_0 : i32, i32
  }
  func.func @transform_12(%arg0: i32) -> (i32, i32) {
    %c0_i32 = arith.constant 0 : i32
    %c0_i32_0 = arith.constant 0 : i32
    %c0_i32_1 = arith.constant 0 : i32
    return %c0_i32, %c0_i32_0 : i32, i32
  }
  func.func @transform_13(%arg0: i32) -> (i32, i32) {
    %c0_i32 = arith.constant 0 : i32
    %c0_i32_0 = arith.constant 0 : i32
    %c0_i32_1 = arith.constant 0 : i32
    return %c0_i32, %c0_i32_0 : i32, i32
  }
  func.func @transform_14(%arg0: i32) -> (i32, i32) {
    %c0_i32 = arith.constant 0 : i32
    %c0_i32_0 = arith.constant 0 : i32
    %c0_i32_1 = arith.constant 0 : i32
    return %c0_i32, %c0_i32_0 : i32, i32
  }
  func.func @transform_15(%arg0: i32) -> (i32, i32) {
    %c0_i32 = arith.constant 0 : i32
    %c0_i32_0 = arith.constant 0 : i32
    %c0_i32_1 = arith.constant 0 : i32
    return %c0_i32, %c0_i32_0 : i32, i32
  }
  func.func @transform_16(%arg0: i32) -> (i32, i32) {
    %c0_i32 = arith.constant 0 : i32
    %c0_i32_0 = arith.constant 0 : i32
    %c0_i32_1 = arith.constant 0 : i32
    return %c0_i32, %c0_i32_0 : i32, i32
  }
  func.func @transform_17(%arg0: i32) -> (i32, i32) {
    %c0_i32 = arith.constant 0 : i32
    %c0_i32_0 = arith.constant 0 : i32
    %c0_i32_1 = arith.constant 0 : i32
    return %c0_i32, %c0_i32_0 : i32, i32
  }
  func.func @transform_18(%arg0: i32) -> (i32, i32) {
    %c0_i32 = arith.constant 0 : i32
    %c0_i32_0 = arith.constant 0 : i32
    %c0_i32_1 = arith.constant 0 : i32
    return %c0_i32, %c0_i32_0 : i32, i32
  }
  func.func @transform_19(%arg0: i32) -> (i32, i32) {
    %c0_i32 = arith.constant 0 : i32
    %c0_i32_0 = arith.constant 0 : i32
    %c0_i32_1 = arith.constant 0 : i32
    return %c0_i32, %c0_i32_0 : i32, i32
  }
  func.func @transform_20(%arg0: i32) -> (i32, i32) {
    %c0_i32 = arith.constant 0 : i32
    %c0_i32_0 = arith.constant 0 : i32
    %c0_i32_1 = arith.constant 0 : i32
    return %c0_i32, %c0_i32_0 : i32, i32
  }
  func.func @transform_21(%arg0: i32) -> (i32, i32) {
    %c0_i32 = arith.constant 0 : i32
    %c0_i32_0 = arith.constant 0 : i32
    %c0_i32_1 = arith.constant 0 : i32
    return %c0_i32, %c0_i32_0 : i32, i32
  }
  func.func @transform_22(%arg0: i32) -> (i32, i32) {
    %c0_i32 = arith.constant 0 : i32
    %c0_i32_0 = arith.constant 0 : i32
    return %arg0, %c0_i32 : i32, i32
  }
  func.func @transform_23(%arg0: i32) -> (i32, i32) {
    %c0_i32 = arith.constant 0 : i32
    %c0_i32_0 = arith.constant 0 : i32
    return %arg0, %c0_i32 : i32, i32
  }
  func.func @transform_24(%arg0: i32) -> (i32, i32) {
    %c0_i32 = arith.constant 0 : i32
    %c0_i32_0 = arith.constant 0 : i32
    return %arg0, %c0_i32 : i32, i32
  }
}

</mosaic_0001>

<llo_original>
// kernel: tpu_custom_call.1
$region0: #{tpu_custom_call.1}
  #allocation0 [shape = 'u32[]', space=smem, size = 0x4, offset = 0x4, fixed_abs, tag = 'smem constant byte address 0x4 - core index']
  #allocation1 [shape = 'u32[144,128]{1,0:T(1,128)}', space=vmem, size = 0x12000, scoped, tag = 'internal scratch']
  #allocation2 [shape = 'f32[1,1]{1,0:T(1,128)S(1)}', space=vmem, size = 0x200, scoped, tag = 'scoped memory for tpu_custom_call.1']
  %s0 = inlined_call_operand.vmem [shape: f32[8,128], index: 0, kind: input, shape index: {}]
  %s1 = inlined_call_operand.vmem [shape: bf16[128,128], index: 1, kind: input, shape index: {}]
  %s2 = inlined_call_operand.vmem [shape: f32[1,128], index: 2, kind: input, shape index: {}]
  %s3 = inlined_call_operand.vmem [shape: bf16[128,128], index: 3, kind: input, shape index: {}]
  %s4 = inlined_call_operand.vmem [shape: f32[1,128], index: 4, kind: input, shape index: {}]
  %s5 = inlined_call_operand.vmem [shape: f32[1,8], index: 5, kind: input, shape index: {}]
  %s6 = inlined_call_operand.vmem [shape: f32[1,8], index: 6, kind: input, shape index: {}]
  %s7 = inlined_call_operand.vmem [shape: f32[128,8], index: 7, kind: input, shape index: {}]
  %s8 = inlined_call_operand.vmem [shape: f32[8,128], index: 8, kind: input, shape index: {}]
  %s9 = inlined_call_operand.vmem [shape: bf16[128,256], index: 9, kind: input, shape index: {}]
  %s10 = inlined_call_operand.vmem [shape: f32[1,256], index: 10, kind: input, shape index: {}]
  %s11 = inlined_call_operand.vmem [shape: f32[1,8], index: 11, kind: input, shape index: {}]
  %s12 = inlined_call_operand.vmem [shape: f32[1,8], index: 12, kind: input, shape index: {}]
  %s13 = inlined_call_operand.vmem [shape: f32[256,8], index: 13, kind: input, shape index: {}]
  %s14 = inlined_call_operand.vmem [shape: f32[8,256], index: 14, kind: input, shape index: {}]
  %s15 = inlined_call_operand.vmem [shape: bf16[256,256], index: 15, kind: input, shape index: {}]
  %s16 = inlined_call_operand.vmem [shape: f32[1,256], index: 16, kind: input, shape index: {}]
  %s17 = inlined_call_operand.vmem [shape: f32[256,4], index: 17, kind: input, shape index: {}]
  %s18 = inlined_call_operand.vmem [shape: f32[4,256], index: 18, kind: input, shape index: {}]
  %s19 = inlined_call_operand.vmem [shape: f32[256,2], index: 19, kind: input, shape index: {}]
  %s20 = inlined_call_operand.vmem [shape: f32[1,128], index: 20, kind: input, shape index: {}]
  %s21 = inlined_call_operand.<no memory space> [shape: f32[1,1], index: 21, kind: input, shape index: {}]
  %s22 = inlined_call_operand.hbm [shape: f32[8,256], index: 22, kind: output, shape index: {0}]
  %s23 = inlined_call_operand.vmem [shape: f32[8,1], index: 23, kind: output, shape index: {1}]
  %s24 = inlined_call_operand.vmem [shape: f32[8,1], index: 24, kind: output, shape index: {2}]
  %25 = xla_tuple %s22, %s23, %s24
  %s26 = sld [smem:[#allocation0]]
  $region114: #{tpu_custom_call.1} parent=0
    _
  %s28 = ssub.s32 1, %s26
  %s29 = scalar_select 0, %s28, %s26
  %v30 = vstv %s21
  %31 = vst [vmem:[#allocation2] sm:$0x1] %v30
  $region1: #{tpu_custom_call.1} parent=0
    #allocation3 [shape = 'u8[8192]{0}', space=vmem, size = 0x2000, scoped, tag = 'output window, operand 0, single buffered']
    #allocation4 [shape = 's32[1]{0}', space=sflag, size = 0x4, scoped, tag = 'scoped memory for tpu_custom_call.1']
    %32 = vsyncpa [#allocation4], 0
    // Predicated region
    $region2: #{tpu_custom_call.1} parent=1 // pred_check
      _
    $region3: #{tpu_custom_call.1} parent=1 // pred_check_branch
      %34 = sbr.rel (0) target = $region5
    $region4: #{tpu_custom_call.1} parent=1 // pred_region
      _
    $region5: #{tpu_custom_call.1} parent=1 // pred_fallthru
      _
    // Predicated region
    $region6: #{tpu_custom_call.1} parent=1 // pred_check
      _
    $region7: #{tpu_custom_call.1} parent=1 // pred_check_branch
      %36 = sbr.rel (0) target = $region9
    $region8: #{tpu_custom_call.1} parent=1 // pred_region
      _
    $region9: #{tpu_custom_call.1} parent=1 // pred_fallthru
      _
    // Predicated region
    $region10: #{tpu_custom_call.1} parent=1 // pred_check
      _
    $region11: #{tpu_custom_call.1} parent=1 // pred_check_branch
      %38 = sbr.rel (0) target = $region13
    $region12: #{tpu_custom_call.1} parent=1 // pred_region
      _
    $region13: #{tpu_custom_call.1} parent=1 // pred_fallthru
      _
    // Predicated region
    $region14: #{tpu_custom_call.1} parent=1 // pred_check
      _
    $region15: #{tpu_custom_call.1} parent=1 // pred_check_branch
      %40 = sbr.rel (0) target = $region17
    $region16: #{tpu_custom_call.1} parent=1 // pred_region
      _
    $region17: #{tpu_custom_call.1} parent=1 // pred_fallthru
      _
    // Predicated region
    $region18: #{tpu_custom_call.1} parent=1 // pred_check
      _
    $region19: #{tpu_custom_call.1} parent=1 // pred_check_branch
      %42 = sbr.rel (0) target = $region21
    $region20: #{tpu_custom_call.1} parent=1 // pred_region
      _
    $region21: #{tpu_custom_call.1} parent=1 // pred_fallthru
      _
    // Predicated region
    $region22: #{tpu_custom_call.1} parent=1 // pred_check
      _
    $region23: #{tpu_custom_call.1} parent=1 // pred_check_branch
      %44 = sbr.rel (0) target = $region25
    $region24: #{tpu_custom_call.1} parent=1 // pred_region
      _
    $region25: #{tpu_custom_call.1} parent=1 // pred_fallthru
      _
    // Predicated region
    $region26: #{tpu_custom_call.1} parent=1 // pred_check
      _
    $region27: #{tpu_custom_call.1} parent=1 // pred_check_branch
      %46 = sbr.rel (0) target = $region29
    $region28: #{tpu_custom_call.1} parent=1 // pred_region
      _
    $region29: #{tpu_custom_call.1} parent=1 // pred_fallthru
      _
    // Predicated region
    $region30: #{tpu_custom_call.1} parent=1 // pred_check
      _
    $region31: #{tpu_custom_call.1} parent=1 // pred_check_branch
      %48 = sbr.rel (0) target = $region33
    $region32: #{tpu_custom_call.1} parent=1 // pred_region
      _
    $region33: #{tpu_custom_call.1} parent=1 // pred_fallthru
      _
    // Predicated region
    $region34: #{tpu_custom_call.1} parent=1 // pred_check
      _
    $region35: #{tpu_custom_call.1} parent=1 // pred_check_branch
      %50 = sbr.rel (0) target = $region37
    $region36: #{tpu_custom_call.1} parent=1 // pred_region
      _
    $region37: #{tpu_custom_call.1} parent=1 // pred_fallthru
      _
    // Predicated region
    $region38: #{tpu_custom_call.1} parent=1 // pred_check
      _
    $region39: #{tpu_custom_call.1} parent=1 // pred_check_branch
      %52 = sbr.rel (0) target = $region41
    $region40: #{tpu_custom_call.1} parent=1 // pred_region
      _
    $region41: #{tpu_custom_call.1} parent=1 // pred_fallthru
      _
    // Predicated region
    $region42: #{tpu_custom_call.1} parent=1 // pred_check
      _
    $region43: #{tpu_custom_call.1} parent=1 // pred_check_branch
      %54 = sbr.rel (0) target = $region45
    $region44: #{tpu_custom_call.1} parent=1 // pred_region
      _
    $region45: #{tpu_custom_call.1} parent=1 // pred_fallthru
      _
    // Predicated region
    $region46: #{tpu_custom_call.1} parent=1 // pred_check
      _
    $region47: #{tpu_custom_call.1} parent=1 // pred_check_branch
      %56 = sbr.rel (0) target = $region49
    $region48: #{tpu_custom_call.1} parent=1 // pred_region
      _
    $region49: #{tpu_custom_call.1} parent=1 // pred_fallthru
      _
    // Predicated region
    $region50: #{tpu_custom_call.1} parent=1 // pred_check
      _
    $region51: #{tpu_custom_call.1} parent=1 // pred_check_branch
      %58 = sbr.rel (0) target = $region53
    $region52: #{tpu_custom_call.1} parent=1 // pred_region
      _
    $region53: #{tpu_custom_call.1} parent=1 // pred_fallthru
      _
    // Predicated region
    $region54: #{tpu_custom_call.1} parent=1 // pred_check
      _
    $region55: #{tpu_custom_call.1} parent=1 // pred_check_branch
      %60 = sbr.rel (0) target = $region57
    $region56: #{tpu_custom_call.1} parent=1 // pred_region
      _
    $region57: #{tpu_custom_call.1} parent=1 // pred_fallthru
      _
    // Predicated region
    $region58: #{tpu_custom_call.1} parent=1 // pred_check
      _
    $region59: #{tpu_custom_call.1} parent=1 // pred_check_branch
      %62 = sbr.rel (0) target = $region61
    $region60: #{tpu_custom_call.1} parent=1 // pred_region
      _
    $region61: #{tpu_custom_call.1} parent=1 // pred_fallthru
      _
    // Predicated region
    $region62: #{tpu_custom_call.1} parent=1 // pred_check
      _
    $region63: #{tpu_custom_call.1} parent=1 // pred_check_branch
      %64 = sbr.rel (0) target = $region65
    $region64: #{tpu_custom_call.1} parent=1 // pred_region
      _
    $region65: #{tpu_custom_call.1} parent=1 // pred_fallthru
      _
    // Predicated region
    $region66: #{tpu_custom_call.1} parent=1 // pred_check
      _
    $region67: #{tpu_custom_call.1} parent=1 // pred_check_branch
      %66 = sbr.rel (0) target = $region69
    $region68: #{tpu_custom_call.1} parent=1 // pred_region
      _
    $region69: #{tpu_custom_call.1} parent=1 // pred_fallthru
      _
    // Predicated region
    $region70: #{tpu_custom_call.1} parent=1 // pred_check
      _
    $region71: #{tpu_custom_call.1} parent=1 // pred_check_branch
      %68 = sbr.rel (0) target = $region73
    $region72: #{tpu_custom_call.1} parent=1 // pred_region
      _
    $region73: #{tpu_custom_call.1} parent=1 // pred_fallthru
      _
    // Predicated region
    $region74: #{tpu_custom_call.1} parent=1 // pred_check
      _
    $region75: #{tpu_custom_call.1} parent=1 // pred_check_branch
      %70 = sbr.rel (0) target = $region77
    $region76: #{tpu_custom_call.1} parent=1 // pred_region
      _
    $region77: #{tpu_custom_call.1} parent=1 // pred_fallthru
      _
    // Predicated region
    $region78: #{tpu_custom_call.1} parent=1 // pred_check
      _
    $region79: #{tpu_custom_call.1} parent=1 // pred_check_branch
      %72 = sbr.rel (0) target = $region81
    $region80: #{tpu_custom_call.1} parent=1 // pred_region
      _
    $region81: #{tpu_custom_call.1} parent=1 // pred_fallthru
      _
    // Predicated region
    $region82: #{tpu_custom_call.1} parent=1 // pred_check
      _
    $region83: #{tpu_custom_call.1} parent=1 // pred_check_branch
      %74 = sbr.rel (0) target = $region85
    $region84: #{tpu_custom_call.1} parent=1 // pred_region
      _
    $region85: #{tpu_custom_call.1} parent=1 // pred_fallthru
      _
    // Predicated region
    $region86: #{tpu_custom_call.1} parent=1 // pred_check
      _
    $region87: #{tpu_custom_call.1} parent=1 // pred_check_branch
      %76 = sbr.rel (0) target = $region89
    $region88: #{tpu_custom_call.1} parent=1 // pred_region
      _
    $region89: #{tpu_custom_call.1} parent=1 // pred_fallthru
      _
    %s78 = smul.u32 0, 8
    %s79 = ssub.s32 2, %s78
    %p80 = scmp.lt.s32.totalorder %s79, 8
    %s81 = scalar_select %p80, %s79, 8
    %s82 = scvt.s32.f32 %s81
    %v83 = vlaneseq
    %v84 = vshrl.u32 %v83, 7
    %v85 = vstv %s81
    %vm86 = vcmp.lt.s32.totalorder %v84, %v85
    %v87 = vsel %vm86, 1, 0
    %v88 = vcvt.s32.f32 %v87
    %v89 = vld [vmem:[%s0] sm:$0xff]
    %v90 = vpack.c.bf16 %v89, %v89
    %v91 = vld [vmem:[%s1] sm:$0xf]
    %v92 = vld [vmem:[%s1 + $0x4] sm:$0xf]
    %v93 = vld [vmem:[%s1 + $0x8] sm:$0xf]
    %v94 = vld [vmem:[%s1 + $0xc] sm:$0xf]
    %v95 = vld [vmem:[%s1 + $0x10] sm:$0xf]
    %v96 = vld [vmem:[%s1 + $0x14] sm:$0xf]
    %v97 = vld [vmem:[%s1 + $0x18] sm:$0xf]
    %v98 = vld [vmem:[%s1 + $0x1c] sm:$0xf]
    %v99 = vld [vmem:[%s1 + $0x20] sm:$0xf]
    %v100 = vld [vmem:[%s1 + $0x24] sm:$0xf]
    %v101 = vld [vmem:[%s1 + $0x28] sm:$0xf]
    %v102 = vld [vmem:[%s1 + $0x2c] sm:$0xf]
    %v103 = vld [vmem:[%s1 + $0x30] sm:$0xf]
    %v104 = vld [vmem:[%s1 + $0x34] sm:$0xf]
    %v105 = vld [vmem:[%s1 + $0x38] sm:$0xf]
    %v106 = vld [vmem:[%s1 + $0x3c] sm:$0xf]
    %v107 = vld [vmem:[%s2] sm:$0x1]
    %v109 = vlaneseq
    %v110 = vshrl.u32 %v109, 7
    %v111 = vsub.s32 0, %v110
    %v112 = vrot.slane %v107, %v111
    %v130 = vunpack.c.l.b16 %v91
    %v131 = vunpack.c.l.b16 %v92
    %v132 = vunpack.c.l.b16 %v93
    %v133 = vunpack.c.l.b16 %v94
    %v134 = vunpack.c.l.b16 %v95
    %v135 = vunpack.c.l.b16 %v96
    %v136 = vunpack.c.l.b16 %v97
    %v137 = vunpack.c.l.b16 %v98
    %v138 = vunpack.c.l.b16 %v99
    %v139 = vunpack.c.l.b16 %v100
    %v140 = vunpack.c.l.b16 %v101
    %v141 = vunpack.c.l.b16 %v102
    %v142 = vunpack.c.l.b16 %v103
    %v143 = vunpack.c.l.b16 %v104
    %v144 = vunpack.c.l.b16 %v105
    %v145 = vunpack.c.l.b16 %v106
    %v146 = vpack.c.b16 %v131, %v130
    %v147 = vpack.c.b16 %v133, %v132
    %v148 = vpack.c.b16 %v135, %v134
    %v149 = vpack.c.b16 %v137, %v136
    %v150 = vpack.c.b16 %v139, %v138
    %v151 = vpack.c.b16 %v141, %v140
    %v152 = vpack.c.b16 %v143, %v142
    %v153 = vpack.c.b16 %v145, %v144
    %162 = vmatprep.subr.bf16.mxu0 0
    %163 = vmatpush1.bf16.msra.mxu0 %v146
    %164 = vmatprep.subr.bf16.mxu0 0
    %165 = vmatpush1.bf16.msra.mxu0 %v147
    %166 = vmatprep.subr.bf16.mxu0 0
    %167 = vmatpush1.bf16.msra.mxu0 %v148
    %168 = vmatprep.subr.bf16.mxu0 0
    %169 = vmatpush1.bf16.msra.mxu0 %v149
    %170 = vmatprep.subr.bf16.mxu0 0
    %171 = vmatpush1.bf16.msra.mxu0 %v150
    %172 = vmatprep.subr.bf16.mxu0 0
    %173 = vmatpush1.bf16.msra.mxu0 %v151
    %174 = vmatprep.subr.bf16.mxu0 0
    %175 = vmatpush1.bf16.msra.mxu0 %v152
    %176 = vmatprep.subr.bf16.mxu0 0
    %177 = vmatpush1.bf16.msra.mxu0 %v153
    %178 = vmatprep.subr.bf16.mxu0 0
    %179 = vmatpush1.bf16.msra.mxu0 0
    %180 = vmatprep.subr.bf16.mxu0 0
    %181 = vmatpush1.bf16.msra.mxu0 0
    %182 = vmatprep.subr.bf16.mxu0 0
    %183 = vmatpush1.bf16.msra.mxu0 0
    %184 = vmatprep.subr.bf16.mxu0 0
    %185 = vmatpush1.bf16.msra.mxu0 0
    %186 = vmatprep.subr.bf16.mxu0 0
    %187 = vmatpush1.bf16.msra.mxu0 0
    %188 = vmatprep.subr.bf16.mxu0 0
    %189 = vmatpush1.bf16.msra.mxu0 0
    %190 = vmatprep.subr.bf16.mxu0 0
    %191 = vmatpush1.bf16.msra.mxu0 0
    %192 = vmatprep.subr.bf16.mxu0 0
    %193 = vmatpush1.bf16.msra.mxu0 0
    %194 = vmatprep.mubr.bf16.mxu0 0
    %195 = vmatmul.mubr.bf16.gmra.mrb[0].mxu0 %v90
    %v196 = vpop.f32.mrb[0].mxu0
    %v197 = vadd.f32 %v112, %v196
    %v198 = vpop.f32.mrb[0].mxu0
    %v199 = vpop.f32.mrb[0].mxu0
    %v200 = vpop.f32.mrb[0].mxu0
    %201 = vdwg.mxu0
    %v202 = vpack.c.bf16 %v197, %v197
    %v203 = vld [vmem:[%s3] sm:$0xf]
    %v204 = vld [vmem:[%s3 + $0x4] sm:$0xf]
    %v205 = vld [vmem:[%s3 + $0x8] sm:$0xf]
    %v206 = vld [vmem:[%s3 + $0xc] sm:$0xf]
    %v207 = vld [vmem:[%s3 + $0x10] sm:$0xf]
    %v208 = vld [vmem:[%s3 + $0x14] sm:$0xf]
    %v209 = vld [vmem:[%s3 + $0x18] sm:$0xf]
    %v210 = vld [vmem:[%s3 + $0x1c] sm:$0xf]
    %v211 = vld [vmem:[%s3 + $0x20] sm:$0xf]
    %v212 = vld [vmem:[%s3 + $0x24] sm:$0xf]
    %v213 = vld [vmem:[%s3 + $0x28] sm:$0xf]
    %v214 = vld [vmem:[%s3 + $0x2c] sm:$0xf]
    %v215 = vld [vmem:[%s3 + $0x30] sm:$0xf]
    %v216 = vld [vmem:[%s3 + $0x34] sm:$0xf]
    %v217 = vld [vmem:[%s3 + $0x38] sm:$0xf]
    %v218 = vld [vmem:[%s3 + $0x3c] sm:$0xf]
    %v219 = vld [vmem:[%s4] sm:$0x1]
    %v221 = vlaneseq
    %v222 = vshrl.u32 %v221, 7
    %v223 = vsub.s32 0, %v222
    %v224 = vrot.slane %v219, %v223
    %v242 = vunpack.c.l.b16 %v203
    %v243 = vunpack.c.l.b16 %v204
    %v244 = vunpack.c.l.b16 %v205
    %v245 = vunpack.c.l.b16 %v206
    %v246 = vunpack.c.l.b16 %v207
    %v247 = vunpack.c.l.b16 %v208
    %v248 = vunpack.c.l.b16 %v209
    %v249 = vunpack.c.l.b16 %v210
    %v250 = vunpack.c.l.b16 %v211
    %v251 = vunpack.c.l.b16 %v212
    %v252 = vunpack.c.l.b16 %v213
    %v253 = vunpack.c.l.b16 %v214
    %v254 = vunpack.c.l.b16 %v215
    %v255 = vunpack.c.l.b16 %v216
    %v256 = vunpack.c.l.b16 %v217
    %v257 = vunpack.c.l.b16 %v218
    %v258 = vpack.c.b16 %v243, %v242
    %v259 = vpack.c.b16 %v245, %v244
    %v260 = vpack.c.b16 %v247, %v246
    %v261 = vpack.c.b16 %v249, %v248
    %v262 = vpack.c.b16 %v251, %v250
    %v263 = vpack.c.b16 %v253, %v252
    %v264 = vpack.c.b16 %v255, %v254
    %v265 = vpack.c.b16 %v257, %v256
    %274 = vmatprep.subr.bf16.mxu0 0
    %275 = vmatpush1.bf16.msra.mxu0 %v258
    %276 = vmatprep.subr.bf16.mxu0 0
    %277 = vmatpush1.bf16.msra.mxu0 %v259
    %278 = vmatprep.subr.bf16.mxu0 0
    %279 = vmatpush1.bf16.msra.mxu0 %v260
    %280 = vmatprep.subr.bf16.mxu0 0
    %281 = vmatpush1.bf16.msra.mxu0 %v261
    %282 = vmatprep.subr.bf16.mxu0 0
    %283 = vmatpush1.bf16.msra.mxu0 %v262
    %284 = vmatprep.subr.bf16.mxu0 0
    %285 = vmatpush1.bf16.msra.mxu0 %v263
    %286 = vmatprep.subr.bf16.mxu0 0
    %287 = vmatpush1.bf16.msra.mxu0 %v264
    %288 = vmatprep.subr.bf16.mxu0 0
    %289 = vmatpush1.bf16.msra.mxu0 %v265
    %290 = vmatprep.subr.bf16.mxu0 0
    %291 = vmatpush1.bf16.msra.mxu0 0
    %292 = vmatprep.subr.bf16.mxu0 0
    %293 = vmatpush1.bf16.msra.mxu0 0
    %294 = vmatprep.subr.bf16.mxu0 0
    %295 = vmatpush1.bf16.msra.mxu0 0
    %296 = vmatprep.subr.bf16.mxu0 0
    %297 = vmatpush1.bf16.msra.mxu0 0
    %298 = vmatprep.subr.bf16.mxu0 0
    %299 = vmatpush1.bf16.msra.mxu0 0
    %300 = vmatprep.subr.bf16.mxu0 0
    %301 = vmatpush1.bf16.msra.mxu0 0
    %302 = vmatprep.subr.bf16.mxu0 0
    %303 = vmatpush1.bf16.msra.mxu0 0
    %304 = vmatprep.subr.bf16.mxu0 0
    %305 = vmatpush1.bf16.msra.mxu0 0
    %306 = vmatprep.mubr.bf16.mxu0 0
    %307 = vmatmul.mubr.bf16.gmra.mrb[0].mxu0 %v202
    %v308 = vpop.f32.mrb[0].mxu0
    %v309 = vadd.f32 %v224, %v308
    %v310 = vpop.f32.mrb[0].mxu0
    %v311 = vpop.f32.mrb[0].mxu0
    %v312 = vpop.f32.mrb[0].mxu0
    %313 = vdwg.mxu0
    %v314 = vmax.f32 %v309, 0.0
    %v315 = vmul.f32 %v314, %v88
    %v316 = vrot.slane %v315, 4
    %v317 = vadd.f32 %v315, %v316
    %v318 = vrot.slane %v317, 2
    %v319 = vadd.f32 %v317, %v318
    %v320 = vrot.slane %v319, 1
    %v321 = vadd.f32 %v319, %v320
    %v322 = vmul.f32 %v315, %v314
    %v323 = vrot.slane %v322, 4
    %v324 = vadd.f32 %v322, %v323
    %v325 = vrot.slane %v324, 2
    %v326 = vadd.f32 %v324, %v325
    %v327 = vrot.slane %v326, 1
    %v328 = vadd.f32 %v326, %v327
    %vm329 = vcmask 1040384
    %v330 = vsel %vm329, %v321, %v328
    %v331 = vld [vmem:[%s7] sm:$0xff]
    %v332 = vld [vmem:[%s7 + $0x8] sm:$0xff]
    %v333 = vld [vmem:[%s7 + $0x10] sm:$0xff]
    %v334 = vld [vmem:[%s7 + $0x18] sm:$0xff]
    %v335 = vld [vmem:[%s7 + $0x20] sm:$0xff]
    %v336 = vld [vmem:[%s7 + $0x28] sm:$0xff]
    %v337 = vld [vmem:[%s7 + $0x30] sm:$0xff]
    %v338 = vld [vmem:[%s7 + $0x38] sm:$0xff]
    %v339 = vld [vmem:[%s7 + $0x40] sm:$0xff]
    %v340 = vld [vmem:[%s7 + $0x48] sm:$0xff]
    %v341 = vld [vmem:[%s7 + $0x50] sm:$0xff]
    %v342 = vld [vmem:[%s7 + $0x58] sm:$0xff]
    %v343 = vld [vmem:[%s7 + $0x60] sm:$0xff]
    %v344 = vld [vmem:[%s7 + $0x68] sm:$0xff]
    %v345 = vld [vmem:[%s7 + $0x70] sm:$0xff]
    %v346 = vld [vmem:[%s7 + $0x78] sm:$0xff]
    %347 = vmatprep.subr.mxu0 0.0
    %348 = vmatpush1.msra.mxu0 %v331
    %349 = vmatprep.subr.mxu0 0.0
    %350 = vmatpush1.msra.mxu0 %v332
    %351 = vmatprep.subr.mxu0 0.0
    %352 = vmatpush1.msra.mxu0 %v333
    %353 = vmatprep.subr.mxu0 0.0
    %354 = vmatpush1.msra.mxu0 %v334
    %355 = vmatprep.subr.mxu0 0.0
    %356 = vmatpush1.msra.mxu0 %v335
    %357 = vmatprep.subr.mxu0 0.0
    %358 = vmatpush1.msra.mxu0 %v336
    %359 = vmatprep.subr.mxu0 0.0
    %360 = vmatpush1.msra.mxu0 %v337
    %361 = vmatprep.subr.mxu0 0.0
    %362 = vmatpush1.msra.mxu0 %v338
    %363 = vmatprep.subr.mxu0 0.0
    %364 = vmatpush1.msra.mxu0 %v339
    %365 = vmatprep.subr.mxu0 0.0
    %366 = vmatpush1.msra.mxu0 %v340
    %367 = vmatprep.subr.mxu0 0.0
    %368 = vmatpush1.msra.mxu0 %v341
    %369 = vmatprep.subr.mxu0 0.0
    %370 = vmatpush1.msra.mxu0 %v342
    %371 = vmatprep.subr.mxu0 0.0
    %372 = vmatpush1.msra.mxu0 %v343
    %373 = vmatprep.subr.mxu0 0.0
    %374 = vmatpush1.msra.mxu0 %v344
    %375 = vmatprep.subr.mxu0 0.0
    %376 = vmatpush1.msra.mxu0 %v345
    %377 = vmatprep.subr.mxu0 0.0
    %378 = vmatpush1.msra.mxu0 %v346
    %379 = vmatprep.subr.mxu0 0.0
    %380 = vmatpush1.msra.mxu0 0.0
    %381 = vmatprep.subr.mxu0 0.0
    %382 = vmatpush1.msra.mxu0 0.0
    %383 = vmatprep.subr.mxu0 0.0
    %384 = vmatpush1.msra.mxu0 0.0
    %385 = vmatprep.subr.mxu0 0.0
    %386 = vmatpush1.msra.mxu0 0.0
    %387 = vmatprep.subr.mxu0 0.0
    %388 = vmatpush1.msra.mxu0 0.0
    %389 = vmatprep.subr.mxu0 0.0
    %390 = vmatpush1.msra.mxu0 0.0
    %391 = vmatprep.subr.mxu0 0.0
    %392 = vmatpush1.msra.mxu0 0.0
    %393 = vmatprep.subr.mxu0 0.0
    %394 = vmatpush1.msra.mxu0 0.0
    %395 = vmatprep.subr.mxu0 0.0
    %396 = vmatpush1.msra.mxu0 0.0
    %397 = vmatprep.subr.mxu0 0.0
    %398 = vmatpush1.msra.mxu0 0.0
    %399 = vmatprep.subr.mxu0 0.0
    %400 = vmatpush1.msra.mxu0 0.0
    %401 = vmatprep.subr.mxu0 0.0
    %402 = vmatpush1.msra.mxu0 0.0
    %403 = vmatprep.subr.mxu0 0.0
    %404 = vmatpush1.msra.mxu0 0.0
    %405 = vmatprep.subr.mxu0 0.0
    %406 = vmatpush1.msra.mxu0 0.0
    %407 = vmatprep.subr.mxu0 0.0
    %408 = vmatpush1.msra.mxu0 0.0
    %409 = vmatprep.subr.mxu0 0.0
    %410 = vmatpush1.msra.mxu0 0.0
    %411 = vmatprep.mubr.f32.mxu0 0.0
    %412 = vmatmul.mubr.f32.gmra.mrb[0].mxu0 %v330
    %v413 = vpop.f32.mrb[0].mxu0
    %v414 = vadd.f32 0.0, %v413
    %v415 = vpop.f32.mrb[0].mxu0
    %416 = vdwg.mxu0
    %s417 = smul.f32 %s82, 16.0
    %v418 = vstv %s417
    %v419 = vrcp.pop %v418
    %v420 = vmul.f32 %v414, %v419
    %v421 = vmul.f32 %v420, %v420
    %v423 = vrot.slane %v421, 7
    %v425 = vsub.f32 %v420, %v423
    %v426 = vadd.f32 %v425, 1e-05
    %v427 = vrsqrt.pop %v426
    %v428 = vld [vmem:[%s5] sm:$0x1]
    %v430 = vlaneseq
    %v431 = vshrl.u32 %v430, 7
    %v432 = vsub.s32 0, %v431
    %v433 = vrot.slane %v428, %v432
    %v435 = vmul.f32 %v427, %v433
    %v436 = vld [vmem:[%s6] sm:$0x1]
    %v438 = vrot.slane %v435, 1
    %v440 = vmul.f32 %v420, %v438
    %v441 = vsub.f32 %v436, %v440
    %v443 = vlaneseq
    %v444 = vshrl.u32 %v443, 7
    %v445 = vsub.s32 0, %v444
    %v446 = vrot.slane %v441, %v445
    %v448 = vsel %vm329, %v438, %v446
    %v449 = vld [vmem:[%s8] sm:$0xff]
    %vm450 = vcmask 64512
    %v452 = vsel %vm450, %v448, 0
    %454 = vmatprep.subr.mxu0 0.0
    %455 = vmatpush1.msra.mxu0 %v449
    %456 = vmatprep.subr.mxu0 0.0
    %457 = vmatpush1.msra.mxu0 0.0
    %458 = vmatprep.subr.mxu0 0.0
    %459 = vmatpush1.msra.mxu0 0.0
    %460 = vmatprep.subr.mxu0 0.0
    %461 = vmatpush1.msra.mxu0 0.0
    %462 = vmatprep.subr.mxu0 0.0
    %463 = vmatpush1.msra.mxu0 0.0
    %464 = vmatprep.subr.mxu0 0.0
    %465 = vmatpush1.msra.mxu0 0.0
    %466 = vmatprep.subr.mxu0 0.0
    %467 = vmatpush1.msra.mxu0 0.0
    %468 = vmatprep.subr.mxu0 0.0
    %469 = vmatpush1.msra.mxu0 0.0
    %470 = vmatprep.subr.mxu0 0.0
    %471 = vmatpush1.msra.mxu0 0.0
    %472 = vmatprep.subr.mxu0 0.0
    %473 = vmatpush1.msra.mxu0 0.0
    %474 = vmatprep.subr.mxu0 0.0
    %475 = vmatpush1.msra.mxu0 0.0
    %476 = vmatprep.subr.mxu0 0.0
    %477 = vmatpush1.msra.mxu0 0.0
    %478 = vmatprep.subr.mxu0 0.0
    %479 = vmatpush1.msra.mxu0 0.0
    %480 = vmatprep.subr.mxu0 0.0
    %481 = vmatpush1.msra.mxu0 0.0
    %482 = vmatprep.subr.mxu0 0.0
    %483 = vmatpush1.msra.mxu0 0.0
    %484 = vmatprep.subr.mxu0 0.0
    %485 = vmatpush1.msra.mxu0 0.0
    %486 = vmatprep.subr.mxu0 0.0
    %487 = vmatpush1.msra.mxu0 0.0
    %488 = vmatprep.subr.mxu0 0.0
    %489 = vmatpush1.msra.mxu0 0.0
    %490 = vmatprep.subr.mxu0 0.0
    %491 = vmatpush1.msra.mxu0 0.0
    %492 = vmatprep.subr.mxu0 0.0
    %493 = vmatpush1.msra.mxu0 0.0
    %494 = vmatprep.subr.mxu0 0.0
    %495 = vmatpush1.msra.mxu0 0.0
    %496 = vmatprep.subr.mxu0 0.0
    %497 = vmatpush1.msra.mxu0 0.0
    %498 = vmatprep.subr.mxu0 0.0
    %499 = vmatpush1.msra.mxu0 0.0
    %500 = vmatprep.subr.mxu0 0.0
    %501 = vmatpush1.msra.mxu0 0.0
    %502 = vmatprep.subr.mxu0 0.0
    %503 = vmatpush1.msra.mxu0 0.0
    %504 = vmatprep.subr.mxu0 0.0
    %505 = vmatpush1.msra.mxu0 0.0
    %506 = vmatprep.subr.mxu0 0.0
    %507 = vmatpush1.msra.mxu0 0.0
    %508 = vmatprep.subr.mxu0 0.0
    %509 = vmatpush1.msra.mxu0 0.0
    %510 = vmatprep.subr.mxu0 0.0
    %511 = vmatpush1.msra.mxu0 0.0
    %512 = vmatprep.subr.mxu0 0.0
    %513 = vmatpush1.msra.mxu0 0.0
    %514 = vmatprep.subr.mxu0 0.0
    %515 = vmatpush1.msra.mxu0 0.0
    %516 = vmatprep.subr.mxu0 0.0
    %517 = vmatpush1.msra.mxu0 0.0
    %518 = vmatprep.mubr.f32.mxu0 0.0
    %519 = vmatmul.mubr.f32.gmra.mrb[0].mxu0 %v452
    %v520 = vpop.f32.mrb[0].mxu0
    %v521 = vadd.f32 0.0, %v520
    %v522 = vpop.f32.mrb[0].mxu0
    %523 = vdwg.mxu0
    %v524 = vlaneseq
    %v525 = vshrl.u32 %v524, 7
    %v526 = vsub.s32 0, %v525
    %v527 = vrot.slane %v521, %v526
    %v528 = vmul.f32 %v314, %v527
    %v529 = vlaneseq
    %v530 = vshrl.u32 %v529, 7
    %v531 = vsub.s32 1, %v530
    %v532 = vrot.slane %v521, %v531
    %v533 = vadd.f32 %v528, %v532
    %v534 = vpack.c.bf16 %v533, %v533
    %v535 = vld [vmem:[%s9] sm:$0xff]
    %v536 = vld [vmem:[%s9 + $0x8] sm:$0xff]
    %v537 = vld [vmem:[%s9 + $0x10] sm:$0xff]
    %v538 = vld [vmem:[%s9 + $0x18] sm:$0xff]
    %v539 = vld [vmem:[%s9 + $0x20] sm:$0xff]
    %v540 = vld [vmem:[%s9 + $0x28] sm:$0xff]
    %v541 = vld [vmem:[%s9 + $0x30] sm:$0xff]
    %v542 = vld [vmem:[%s9 + $0x38] sm:$0xff]
    %v543 = vld [vmem:[%s9 + $0x40] sm:$0xff]
    %v544 = vld [vmem:[%s9 + $0x48] sm:$0xff]
    %v545 = vld [vmem:[%s9 + $0x50] sm:$0xff]
    %v546 = vld [vmem:[%s9 + $0x58] sm:$0xff]
    %v547 = vld [vmem:[%s9 + $0x60] sm:$0xff]
    %v548 = vld [vmem:[%s9 + $0x68] sm:$0xff]
    %v549 = vld [vmem:[%s9 + $0x70] sm:$0xff]
    %v550 = vld [vmem:[%s9 + $0x78] sm:$0xff]
    %v551 = vld [vmem:[%s10] sm:$0x3]
    %v553 = vlaneseq
    %v554 = vshrl.u32 %v553, 7
    %v555 = vsub.s32 0, %v554
    %v556 = vrot.slane %v551, %v555
    %v557 = vlaneseq
    %v558 = vshrl.u32 %v557, 7
    %v559 = vsub.s32 1, %v558
    %v560 = vrot.slane %v551, %v559
    %v579 = vunpack.c.l.b16 %v535
    %v580 = vunpack.c.h.b16 %v535
    %v581 = vunpack.c.l.b16 %v536
    %v582 = vunpack.c.h.b16 %v536
    %v583 = vunpack.c.l.b16 %v537
    %v584 = vunpack.c.h.b16 %v537
    %v585 = vunpack.c.l.b16 %v538
    %v586 = vunpack.c.h.b16 %v538
    %v587 = vunpack.c.l.b16 %v539
    %v588 = vunpack.c.h.b16 %v539
    %v589 = vunpack.c.l.b16 %v540
    %v590 = vunpack.c.h.b16 %v540
    %v591 = vunpack.c.l.b16 %v541
    %v592 = vunpack.c.h.b16 %v541
    %v593 = vunpack.c.l.b16 %v542
    %v594 = vunpack.c.h.b16 %v542
    %v595 = vunpack.c.l.b16 %v543
    %v596 = vunpack.c.h.b16 %v543
    %v597 = vunpack.c.l.b16 %v544
    %v598 = vunpack.c.h.b16 %v544
    %v599 = vunpack.c.l.b16 %v545
    %v600 = vunpack.c.h.b16 %v545
    %v601 = vunpack.c.l.b16 %v546
    %v602 = vunpack.c.h.b16 %v546
    %v603 = vunpack.c.l.b16 %v547
    %v604 = vunpack.c.h.b16 %v547
    %v605 = vunpack.c.l.b16 %v548
    %v606 = vunpack.c.h.b16 %v548
    %v607 = vunpack.c.l.b16 %v549
    %v608 = vunpack.c.h.b16 %v549
    %v609 = vunpack.c.l.b16 %v550
    %v610 = vunpack.c.h.b16 %v550
    %v611 = vpack.c.b16 %v581, %v579
    %v612 = vpack.c.b16 %v582, %v580
    %v613 = vpack.c.b16 %v585, %v583
    %v614 = vpack.c.b16 %v586, %v584
    %v615 = vpack.c.b16 %v589, %v587
    %v616 = vpack.c.b16 %v590, %v588
    %v617 = vpack.c.b16 %v593, %v591
    %v618 = vpack.c.b16 %v594, %v592
    %v619 = vpack.c.b16 %v597, %v595
    %v620 = vpack.c.b16 %v598, %v596
    %v621 = vpack.c.b16 %v601, %v599
    %v622 = vpack.c.b16 %v602, %v600
    %v623 = vpack.c.b16 %v605, %v603
    %v624 = vpack.c.b16 %v606, %v604
    %v625 = vpack.c.b16 %v609, %v607
    %v626 = vpack.c.b16 %v610, %v608
    %643 = vmatprep.subr.bf16.mxu0 %v612
    %644 = vmatpush1.bf16.msra.mxu0 %v611
    %645 = vmatprep.subr.bf16.mxu0 %v614
    %646 = vmatpush1.bf16.msra.mxu0 %v613
    %647 = vmatprep.subr.bf16.mxu0 %v616
    %648 = vmatpush1.bf16.msra.mxu0 %v615
    %649 = vmatprep.subr.bf16.mxu0 %v618
    %650 = vmatpush1.bf16.msra.mxu0 %v617
    %651 = vmatprep.subr.bf16.mxu0 %v620
    %652 = vmatpush1.bf16.msra.mxu0 %v619
    %653 = vmatprep.subr.bf16.mxu0 %v622
    %654 = vmatpush1.bf16.msra.mxu0 %v621
    %655 = vmatprep.subr.bf16.mxu0 %v624
    %656 = vmatpush1.bf16.msra.mxu0 %v623
    %657 = vmatprep.subr.bf16.mxu0 %v626
    %658 = vmatpush1.bf16.msra.mxu0 %v625
    %659 = vmatprep.subr.bf16.mxu0 0
    %660 = vmatpush1.bf16.msra.mxu0 0
    %661 = vmatprep.subr.bf16.mxu0 0
    %662 = vmatpush1.bf16.msra.mxu0 0
    %663 = vmatprep.subr.bf16.mxu0 0
    %664 = vmatpush1.bf16.msra.mxu0 0
    %665 = vmatprep.subr.bf16.mxu0 0
    %666 = vmatpush1.bf16.msra.mxu0 0
    %667 = vmatprep.subr.bf16.mxu0 0
    %668 = vmatpush1.bf16.msra.mxu0 0
    %669 = vmatprep.subr.bf16.mxu0 0
    %670 = vmatpush1.bf16.msra.mxu0 0
    %671 = vmatprep.subr.bf16.mxu0 0
    %672 = vmatpush1.bf16.msra.mxu0 0
    %673 = vmatprep.subr.bf16.mxu0 0
    %674 = vmatpush1.bf16.msra.mxu0 0
    %675 = vmatprep.mubr.bf16.mxu0 0
    %676 = vmatmul.mubr.bf16.gmra.mrb[0].mxu0 %v534
    %v677 = vpop.f32.mrb[0].mxu0
    %v678 = vadd.f32 %v556, %v677
    %v679 = vpop.f32.mrb[0].mxu0
    %v680 = vadd.f32 %v560, %v679
    %v681 = vpop.f32.mrb[0].mxu0
    %v682 = vpop.f32.mrb[0].mxu0
    %683 = vdwg.mxu0
    %v684 = vmax.f32 %v678, 0.0
    %v685 = vmax.f32 %v680, 0.0
    %v686 = vmul.f32 %v684, %v88
    %v687 = vmul.f32 %v685, %v88
    %v688 = vrot.slane %v686, 4
    %v689 = vadd.f32 %v686, %v688
    %v690 = vrot.slane %v689, 2
    %v691 = vadd.f32 %v689, %v690
    %v692 = vrot.slane %v691, 1
    %v693 = vadd.f32 %v691, %v692
    %v694 = vrot.slane %v687, 4
    %v695 = vadd.f32 %v687, %v694
    %v696 = vrot.slane %v695, 2
    %v697 = vadd.f32 %v695, %v696
    %v698 = vrot.slane %v697, 1
    %v699 = vadd.f32 %v697, %v698
    %v700 = vmul.f32 %v686, %v684
    %v701 = vmul.f32 %v687, %v685
    %v702 = vrot.slane %v700, 4
    %v703 = vadd.f32 %v700, %v702
    %v704 = vrot.slane %v703, 2
    %v705 = vadd.f32 %v703, %v704
    %v706 = vrot.slane %v705, 1
    %v707 = vadd.f32 %v705, %v706
    %v708 = vrot.slane %v701, 4
    %v709 = vadd.f32 %v701, %v708
    %v710 = vrot.slane %v709, 2
    %v711 = vadd.f32 %v709, %v710
    %v712 = vrot.slane %v711, 1
    %v713 = vadd.f32 %v711, %v712
    %v714 = vsel %vm329, %v693, %v707
    %v715 = vsel %vm329, %v699, %v713
    %v716 = vld [vmem:[%s13] sm:$0xff]
    %v717 = vld [vmem:[%s13 + $0x8] sm:$0xff]
    %v718 = vld [vmem:[%s13 + $0x10] sm:$0xff]
    %v719 = vld [vmem:[%s13 + $0x18] sm:$0xff]
    %v720 = vld [vmem:[%s13 + $0x20] sm:$0xff]
    %v721 = vld [vmem:[%s13 + $0x28] sm:$0xff]
    %v722 = vld [vmem:[%s13 + $0x30] sm:$0xff]
    %v723 = vld [vmem:[%s13 + $0x38] sm:$0xff]
    %v724 = vld [vmem:[%s13 + $0x40] sm:$0xff]
    %v725 = vld [vmem:[%s13 + $0x48] sm:$0xff]
    %v726 = vld [vmem:[%s13 + $0x50] sm:$0xff]
    %v727 = vld [vmem:[%s13 + $0x58] sm:$0xff]
    %v728 = vld [vmem:[%s13 + $0x60] sm:$0xff]
    %v729 = vld [vmem:[%s13 + $0x68] sm:$0xff]
    %v730 = vld [vmem:[%s13 + $0x70] sm:$0xff]
    %v731 = vld [vmem:[%s13 + $0x78] sm:$0xff]
    %v732 = vld [vmem:[%s13 + $0x80] sm:$0xff]
    %v733 = vld [vmem:[%s13 + $0x88] sm:$0xff]
    %v734 = vld [vmem:[%s13 + $0x90] sm:$0xff]
    %v735 = vld [vmem:[%s13 + $0x98] sm:$0xff]
    %v736 = vld [vmem:[%s13 + $0xa0] sm:$0xff]
    %v737 = vld [vmem:[%s13 + $0xa8] sm:$0xff]
    %v738 = vld [vmem:[%s13 + $0xb0] sm:$0xff]
    %v739 = vld [vmem:[%s13 + $0xb8] sm:$0xff]
    %v740 = vld [vmem:[%s13 + $0xc0] sm:$0xff]
    %v741 = vld [vmem:[%s13 + $0xc8] sm:$0xff]
    %v742 = vld [vmem:[%s13 + $0xd0] sm:$0xff]
    %v743 = vld [vmem:[%s13 + $0xd8] sm:$0xff]
    %v744 = vld [vmem:[%s13 + $0xe0] sm:$0xff]
    %v745 = vld [vmem:[%s13 + $0xe8] sm:$0xff]
    %v746 = vld [vmem:[%s13 + $0xf0] sm:$0xff]
    %v747 = vld [vmem:[%s13 + $0xf8] sm:$0xff]
    %748 = vmatprep.subr.mxu0 0.0
    %749 = vmatpush1.msra.mxu0 %v716
    %750 = vmatprep.subr.mxu0 0.0
    %751 = vmatpush1.msra.mxu0 %v717
    %752 = vmatprep.subr.mxu0 0.0
    %753 = vmatpush1.msra.mxu0 %v718
    %754 = vmatprep.subr.mxu0 0.0
    %755 = vmatpush1.msra.mxu0 %v719
    %756 = vmatprep.subr.mxu0 0.0
    %757 = vmatpush1.msra.mxu0 %v720
    %758 = vmatprep.subr.mxu0 0.0
    %759 = vmatpush1.msra.mxu0 %v721
    %760 = vmatprep.subr.mxu0 0.0
    %761 = vmatpush1.msra.mxu0 %v722
    %762 = vmatprep.subr.mxu0 0.0
    %763 = vmatpush1.msra.mxu0 %v723
    %764 = vmatprep.subr.mxu0 0.0
    %765 = vmatpush1.msra.mxu0 %v724
    %766 = vmatprep.subr.mxu0 0.0
    %767 = vmatpush1.msra.mxu0 %v725
    %768 = vmatprep.subr.mxu0 0.0
    %769 = vmatpush1.msra.mxu0 %v726
    %770 = vmatprep.subr.mxu0 0.0
    %771 = vmatpush1.msra.mxu0 %v727
    %772 = vmatprep.subr.mxu0 0.0
    %773 = vmatpush1.msra.mxu0 %v728
    %774 = vmatprep.subr.mxu0 0.0
    %775 = vmatpush1.msra.mxu0 %v729
    %776 = vmatprep.subr.mxu0 0.0
    %777 = vmatpush1.msra.mxu0 %v730
    %778 = vmatprep.subr.mxu0 0.0
    %779 = vmatpush1.msra.mxu0 %v731
    %780 = vmatprep.subr.mxu0 0.0
    %781 = vmatpush1.msra.mxu0 %v732
    %782 = vmatprep.subr.mxu0 0.0
    %783 = vmatpush1.msra.mxu0 %v733
    %784 = vmatprep.subr.mxu0 0.0
    %785 = vmatpush1.msra.mxu0 %v734
    %786 = vmatprep.subr.mxu0 0.0
    %787 = vmatpush1.msra.mxu0 %v735
    %788 = vmatprep.subr.mxu0 0.0
    %789 = vmatpush1.msra.mxu0 %v736
    %790 = vmatprep.subr.mxu0 0.0
    %791 = vmatpush1.msra.mxu0 %v737
    %792 = vmatprep.subr.mxu0 0.0
    %793 = vmatpush1.msra.mxu0 %v738
    %794 = vmatprep.subr.mxu0 0.0
    %795 = vmatpush1.msra.mxu0 %v739
    %796 = vmatprep.subr.mxu0 0.0
    %797 = vmatpush1.msra.mxu0 %v740
    %798 = vmatprep.subr.mxu0 0.0
    %799 = vmatpush1.msra.mxu0 %v741
    %800 = vmatprep.subr.mxu0 0.0
    %801 = vmatpush1.msra.mxu0 %v742
    %802 = vmatprep.subr.mxu0 0.0
    %803 = vmatpush1.msra.mxu0 %v743
    %804 = vmatprep.subr.mxu0 0.0
    %805 = vmatpush1.msra.mxu0 %v744
    %806 = vmatprep.subr.mxu0 0.0
    %807 = vmatpush1.msra.mxu0 %v745
    %808 = vmatprep.subr.mxu0 0.0
    %809 = vmatpush1.msra.mxu0 %v746
    %810 = vmatprep.subr.mxu0 0.0
    %811 = vmatpush1.msra.mxu0 %v747
    %812 = vmatprep.mubr.f32.mxu0 %v715
    %813 = vmatmul.mubr.f32.gmra.mrb[0].mxu0 %v714
    %v814 = vpop.f32.mrb[0].mxu0
    %v815 = vadd.f32 0.0, %v814
    %v816 = vpop.f32.mrb[0].mxu0
    %817 = vdwg.mxu0
    %s818 = smul.f32 %s82, 32.0
    %v819 = vstv %s818
    %v820 = vrcp.pop %v819
    %v821 = vmul.f32 %v815, %v820
    %v822 = vmul.f32 %v821, %v821
    %v824 = vrot.slane %v822, 7
    %v826 = vsub.f32 %v821, %v824
    %v827 = vadd.f32 %v826, 1e-05
    %v828 = vrsqrt.pop %v827
    %v829 = vld [vmem:[%s11] sm:$0x1]
    %v831 = vlaneseq
    %v832 = vshrl.u32 %v831, 7
    %v833 = vsub.s32 0, %v832
    %v834 = vrot.slane %v829, %v833
    %v836 = vmul.f32 %v828, %v834
    %v837 = vld [vmem:[%s12] sm:$0x1]
    %v839 = vrot.slane %v836, 1
    %v841 = vmul.f32 %v821, %v839
    %v842 = vsub.f32 %v837, %v841
    %v844 = vlaneseq
    %v845 = vshrl.u32 %v844, 7
    %v846 = vsub.s32 0, %v845
    %v847 = vrot.slane %v842, %v846
    %v849 = vsel %vm329, %v839, %v847
    %v850 = vld [vmem:[%s14] sm:$0xff]
    %v851 = vld [vmem:[%s14 + $0x8] sm:$0xff]
    %v853 = vsel %vm450, %v849, 0
    %855 = vmatprep.subr.mxu0 %v851
    %856 = vmatpush1.msra.mxu0 %v850
    %857 = vmatprep.subr.mxu0 0.0
    %858 = vmatpush1.msra.mxu0 0.0
    %859 = vmatprep.subr.mxu0 0.0
    %860 = vmatpush1.msra.mxu0 0.0
    %861 = vmatprep.subr.mxu0 0.0
    %862 = vmatpush1.msra.mxu0 0.0
    %863 = vmatprep.subr.mxu0 0.0
    %864 = vmatpush1.msra.mxu0 0.0
    %865 = vmatprep.subr.mxu0 0.0
    %866 = vmatpush1.msra.mxu0 0.0
    %867 = vmatprep.subr.mxu0 0.0
    %868 = vmatpush1.msra.mxu0 0.0
    %869 = vmatprep.subr.mxu0 0.0
    %870 = vmatpush1.msra.mxu0 0.0
    %871 = vmatprep.subr.mxu0 0.0
    %872 = vmatpush1.msra.mxu0 0.0
    %873 = vmatprep.subr.mxu0 0.0
    %874 = vmatpush1.msra.mxu0 0.0
    %875 = vmatprep.subr.mxu0 0.0
    %876 = vmatpush1.msra.mxu0 0.0
    %877 = vmatprep.subr.mxu0 0.0
    %878 = vmatpush1.msra.mxu0 0.0
    %879 = vmatprep.subr.mxu0 0.0
    %880 = vmatpush1.msra.mxu0 0.0
    %881 = vmatprep.subr.mxu0 0.0
    %882 = vmatpush1.msra.mxu0 0.0
    %883 = vmatprep.subr.mxu0 0.0
    %884 = vmatpush1.msra.mxu0 0.0
    %885 = vmatprep.subr.mxu0 0.0
    %886 = vmatpush1.msra.mxu0 0.0
    %887 = vmatprep.subr.mxu0 0.0
    %888 = vmatpush1.msra.mxu0 0.0
    %889 = vmatprep.subr.mxu0 0.0
    %890 = vmatpush1.msra.mxu0 0.0
    %891 = vmatprep.subr.mxu0 0.0
    %892 = vmatpush1.msra.mxu0 0.0
    %893 = vmatprep.subr.mxu0 0.0
    %894 = vmatpush1.msra.mxu0 0.0
    %895 = vmatprep.subr.mxu0 0.0
    %896 = vmatpush1.msra.mxu0 0.0
    %897 = vmatprep.subr.mxu0 0.0
    %898 = vmatpush1.msra.mxu0 0.0
    %899 = vmatprep.subr.mxu0 0.0
    %900 = vmatpush1.msra.mxu0 0.0
    %901 = vmatprep.subr.mxu0 0.0
    %902 = vmatpush1.msra.mxu0 0.0
    %903 = vmatprep.subr.mxu0 0.0
    %904 = vmatpush1.msra.mxu0 0.0
    %905 = vmatprep.subr.mxu0 0.0
    %906 = vmatpush1.msra.mxu0 0.0
    %907 = vmatprep.subr.mxu0 0.0
    %908 = vmatpush1.msra.mxu0 0.0
    %909 = vmatprep.subr.mxu0 0.0
    %910 = vmatpush1.msra.mxu0 0.0
    %911 = vmatprep.subr.mxu0 0.0
    %912 = vmatpush1.msra.mxu0 0.0
    %913 = vmatprep.subr.mxu0 0.0
    %914 = vmatpush1.msra.mxu0 0.0
    %915 = vmatprep.subr.mxu0 0.0
    %916 = vmatpush1.msra.mxu0 0.0
    %917 = vmatprep.subr.mxu0 0.0
    %918 = vmatpush1.msra.mxu0 0.0
    %919 = vmatprep.mubr.f32.mxu0 0.0
    %920 = vmatmul.mubr.f32.gmra.mrb[0].mxu0 %v853
    %v921 = vpop.f32.mrb[0].mxu0
    %v922 = vadd.f32 0.0, %v921
    %v923 = vpop.f32.mrb[0].mxu0
    %v924 = vadd.f32 0.0, %v923
    %925 = vdwg.mxu0
    %v926 = vlaneseq
    %v927 = vshrl.u32 %v926, 7
    %v928 = vsub.s32 0, %v927
    %v929 = vrot.slane %v922, %v928
    %v930 = vlaneseq
    %v931 = vshrl.u32 %v930, 7
    %v932 = vsub.s32 0, %v931
    %v933 = vrot.slane %v924, %v932
    %v934 = vmul.f32 %v684, %v929
    %v935 = vmul.f32 %v685, %v933
    %v936 = vlaneseq
    %v937 = vshrl.u32 %v936, 7
    %v938 = vsub.s32 1, %v937
    %v939 = vrot.slane %v922, %v938
    %v940 = vlaneseq
    %v941 = vshrl.u32 %v940, 7
    %v942 = vsub.s32 1, %v941
    %v943 = vrot.slane %v924, %v942
    %v944 = vadd.f32 %v934, %v939
    %v945 = vadd.f32 %v935, %v943
    %v946 = vpack.c.bf16 %v944, %v944
    %v947 = vpack.c.bf16 %v945, %v945
    %v948 = vld [vmem:[%s15] sm:$0xff]
    %v949 = vld [vmem:[%s15 + $0x8] sm:$0xff]
    %v950 = vld [vmem:[%s15 + $0x10] sm:$0xff]
    %v951 = vld [vmem:[%s15 + $0x18] sm:$0xff]
    %v952 = vld [vmem:[%s15 + $0x20] sm:$0xff]
    %v953 = vld [vmem:[%s15 + $0x28] sm:$0xff]
    %v954 = vld [vmem:[%s15 + $0x30] sm:$0xff]
    %v955 = vld [vmem:[%s15 + $0x38] sm:$0xff]
    %v956 = vld [vmem:[%s15 + $0x40] sm:$0xff]
    %v957 = vld [vmem:[%s15 + $0x48] sm:$0xff]
    %v958 = vld [vmem:[%s15 + $0x50] sm:$0xff]
    %v959 = vld [vmem:[%s15 + $0x58] sm:$0xff]
    %v960 = vld [vmem:[%s15 + $0x60] sm:$0xff]
    %v961 = vld [vmem:[%s15 + $0x68] sm:$0xff]
    %v962 = vld [vmem:[%s15 + $0x70] sm:$0xff]
    %v963 = vld [vmem:[%s15 + $0x78] sm:$0xff]
    %v964 = vld [vmem:[%s15 + $0x80] sm:$0xff]
    %v965 = vld [vmem:[%s15 + $0x88] sm:$0xff]
    %v966 = vld [vmem:[%s15 + $0x90] sm:$0xff]
    %v967 = vld [vmem:[%s15 + $0x98] sm:$0xff]
    %v968 = vld [vmem:[%s15 + $0xa0] sm:$0xff]
    %v969 = vld [vmem:[%s15 + $0xa8] sm:$0xff]
    %v970 = vld [vmem:[%s15 + $0xb0] sm:$0xff]
    %v971 = vld [vmem:[%s15 + $0xb8] sm:$0xff]
    %v972 = vld [vmem:[%s15 + $0xc0] sm:$0xff]
    %v973 = vld [vmem:[%s15 + $0xc8] sm:$0xff]
    %v974 = vld [vmem:[%s15 + $0xd0] sm:$0xff]
    %v975 = vld [vmem:[%s15 + $0xd8] sm:$0xff]
    %v976 = vld [vmem:[%s15 + $0xe0] sm:$0xff]
    %v977 = vld [vmem:[%s15 + $0xe8] sm:$0xff]
    %v978 = vld [vmem:[%s15 + $0xf0] sm:$0xff]
    %v979 = vld [vmem:[%s15 + $0xf8] sm:$0xff]
    %v980 = vld [vmem:[%s16] sm:$0x3]
    %v982 = vlaneseq
    %v983 = vshrl.u32 %v982, 7
    %v984 = vsub.s32 0, %v983
    %v985 = vrot.slane %v980, %v984
    %v986 = vlaneseq
    %v987 = vshrl.u32 %v986, 7
    %v988 = vsub.s32 1, %v987
    %v989 = vrot.slane %v980, %v988
    %v1024 = vunpack.c.l.b16 %v948
    %v1025 = vunpack.c.h.b16 %v948
    %v1026 = vunpack.c.l.b16 %v949
    %v1027 = vunpack.c.h.b16 %v949
    %v1028 = vunpack.c.l.b16 %v950
    %v1029 = vunpack.c.h.b16 %v950
    %v1030 = vunpack.c.l.b16 %v951
    %v1031 = vunpack.c.h.b16 %v951
    %v1032 = vunpack.c.l.b16 %v952
    %v1033 = vunpack.c.h.b16 %v952
    %v1034 = vunpack.c.l.b16 %v953
    %v1035 = vunpack.c.h.b16 %v953
    %v1036 = vunpack.c.l.b16 %v954
    %v1037 = vunpack.c.h.b16 %v954
    %v1038 = vunpack.c.l.b16 %v955
    %v1039 = vunpack.c.h.b16 %v955
    %v1040 = vunpack.c.l.b16 %v956
    %v1041 = vunpack.c.h.b16 %v956
    %v1042 = vunpack.c.l.b16 %v957
    %v1043 = vunpack.c.h.b16 %v957
    %v1044 = vunpack.c.l.b16 %v958
    %v1045 = vunpack.c.h.b16 %v958
    %v1046 = vunpack.c.l.b16 %v959
    %v1047 = vunpack.c.h.b16 %v959
    %v1048 = vunpack.c.l.b16 %v960
    %v1049 = vunpack.c.h.b16 %v960
    %v1050 = vunpack.c.l.b16 %v961
    %v1051 = vunpack.c.h.b16 %v961
    %v1052 = vunpack.c.l.b16 %v962
    %v1053 = vunpack.c.h.b16 %v962
    %v1054 = vunpack.c.l.b16 %v963
    %v1055 = vunpack.c.h.b16 %v963
    %v1056 = vunpack.c.l.b16 %v964
    %v1057 = vunpack.c.h.b16 %v964
    %v1058 = vunpack.c.l.b16 %v965
    %v1059 = vunpack.c.h.b16 %v965
    %v1060 = vunpack.c.l.b16 %v966
    %v1061 = vunpack.c.h.b16 %v966
    %v1062 = vunpack.c.l.b16 %v967
    %v1063 = vunpack.c.h.b16 %v967
    %v1064 = vunpack.c.l.b16 %v968
    %v1065 = vunpack.c.h.b16 %v968
    %v1066 = vunpack.c.l.b16 %v969
    %v1067 = vunpack.c.h.b16 %v969
    %v1068 = vunpack.c.l.b16 %v970
    %v1069 = vunpack.c.h.b16 %v970
    %v1070 = vunpack.c.l.b16 %v971
    %v1071 = vunpack.c.h.b16 %v971
    %v1072 = vunpack.c.l.b16 %v972
    %v1073 = vunpack.c.h.b16 %v972
    %v1074 = vunpack.c.l.b16 %v973
    %v1075 = vunpack.c.h.b16 %v973
    %v1076 = vunpack.c.l.b16 %v974
    %v1077 = vunpack.c.h.b16 %v974
    %v1078 = vunpack.c.l.b16 %v975
    %v1079 = vunpack.c.h.b16 %v975
    %v1080 = vunpack.c.l.b16 %v976
    %v1081 = vunpack.c.h.b16 %v976
    %v1082 = vunpack.c.l.b16 %v977
    %v1083 = vunpack.c.h.b16 %v977
    %v1084 = vunpack.c.l.b16 %v978
    %v1085 = vunpack.c.h.b16 %v978
    %v1086 = vunpack.c.l.b16 %v979
    %v1087 = vunpack.c.h.b16 %v979
    %v1088 = vpack.c.b16 %v1026, %v1024
    %v1089 = vpack.c.b16 %v1027, %v1025
    %v1090 = vpack.c.b16 %v1030, %v1028
    %v1091 = vpack.c.b16 %v1031, %v1029
    %v1092 = vpack.c.b16 %v1034, %v1032
    %v1093 = vpack.c.b16 %v1035, %v1033
    %v1094 = vpack.c.b16 %v1038, %v1036
    %v1095 = vpack.c.b16 %v1039, %v1037
    %v1096 = vpack.c.b16 %v1042, %v1040
    %v1097 = vpack.c.b16 %v1043, %v1041
    %v1098 = vpack.c.b16 %v1046, %v1044
    %v1099 = vpack.c.b16 %v1047, %v1045
    %v1100 = vpack.c.b16 %v1050, %v1048
    %v1101 = vpack.c.b16 %v1051, %v1049
    %v1102 = vpack.c.b16 %v1054, %v1052
    %v1103 = vpack.c.b16 %v1055, %v1053
    %v1104 = vpack.c.b16 %v1058, %v1056
    %v1105 = vpack.c.b16 %v1059, %v1057
    %v1106 = vpack.c.b16 %v1062, %v1060
    %v1107 = vpack.c.b16 %v1063, %v1061
    %v1108 = vpack.c.b16 %v1066, %v1064
    %v1109 = vpack.c.b16 %v1067, %v1065
    %v1110 = vpack.c.b16 %v1070, %v1068
    %v1111 = vpack.c.b16 %v1071, %v1069
    %v1112 = vpack.c.b16 %v1074, %v1072
    %v1113 = vpack.c.b16 %v1075, %v1073
    %v1114 = vpack.c.b16 %v1078, %v1076
    %v1115 = vpack.c.b16 %v1079, %v1077
    %v1116 = vpack.c.b16 %v1082, %v1080
    %v1117 = vpack.c.b16 %v1083, %v1081
    %v1118 = vpack.c.b16 %v1086, %v1084
    %v1119 = vpack.c.b16 %v1087, %v1085
    %1152 = vmatprep.subr.bf16.mxu0 %v1089
    %1153 = vmatpush1.bf16.msra.mxu0 %v1088
    %1154 = vmatprep.subr.bf16.mxu0 %v1091
    %1155 = vmatpush1.bf16.msra.mxu0 %v1090
    %1156 = vmatprep.subr.bf16.mxu0 %v1093
    %1157 = vmatpush1.bf16.msra.mxu0 %v1092
    %1158 = vmatprep.subr.bf16.mxu0 %v1095
    %1159 = vmatpush1.bf16.msra.mxu0 %v1094
    %1160 = vmatprep.subr.bf16.mxu0 %v1097
    %1161 = vmatpush1.bf16.msra.mxu0 %v1096
    %1162 = vmatprep.subr.bf16.mxu0 %v1099
    %1163 = vmatpush1.bf16.msra.mxu0 %v1098
    %1164 = vmatprep.subr.bf16.mxu0 %v1101
    %1165 = vmatpush1.bf16.msra.mxu0 %v1100
    %1166 = vmatprep.subr.bf16.mxu0 %v1103
    %1167 = vmatpush1.bf16.msra.mxu0 %v1102
    %1168 = vmatprep.subr.bf16.mxu0 %v1105
    %1169 = vmatpush1.bf16.msra.mxu0 %v1104
    %1170 = vmatprep.subr.bf16.mxu0 %v1107
    %1171 = vmatpush1.bf16.msra.mxu0 %v1106
    %1172 = vmatprep.subr.bf16.mxu0 %v1109
    %1173 = vmatpush1.bf16.msra.mxu0 %v1108
    %1174 = vmatprep.subr.bf16.mxu0 %v1111
    %1175 = vmatpush1.bf16.msra.mxu0 %v1110
    %1176 = vmatprep.subr.bf16.mxu0 %v1113
    %1177 = vmatpush1.bf16.msra.mxu0 %v1112
    %1178 = vmatprep.subr.bf16.mxu0 %v1115
    %1179 = vmatpush1.bf16.msra.mxu0 %v1114
    %1180 = vmatprep.subr.bf16.mxu0 %v1117
    %1181 = vmatpush1.bf16.msra.mxu0 %v1116
    %1182 = vmatprep.subr.bf16.mxu0 %v1119
    %1183 = vmatpush1.bf16.msra.mxu0 %v1118
    %1184 = vmatprep.mubr.bf16.mxu0 %v947
    %1185 = vmatmul.mubr.bf16.gmra.mrb[0].mxu0 %v946
    %v1186 = vpop.f32.mrb[0].mxu0
    %v1187 = vadd.f32 %v985, %v1186
    %v1188 = vpop.f32.mrb[0].mxu0
    %v1189 = vadd.f32 %v989, %v1188
    %v1190 = vpop.f32.mrb[0].mxu0
    %v1191 = vpop.f32.mrb[0].mxu0
    %1192 = vdwg.mxu0
    %v1193 = vsub.f32 0.0, %v1187
    %v1194 = vsub.f32 0.0, %v1189
    %v1195 = vmul.f32 %v1193, 1.442695
    %v1196 = vpow.pop %v1195
    %v1197 = vmul.f32 %v1194, 1.442695
    %v1198 = vpow.pop %v1197
    %v1199 = vadd.f32 %v1196, 1.0
    %v1200 = vadd.f32 %v1198, 1.0
    %v1201 = vrcp.pop %v1199
    %v1202 = vrcp.pop %v1200
    %v1203 = vld [vmem:[%s17] sm:$0xff]
    %v1204 = vld [vmem:[%s17 + $0x8] sm:$0xff]
    %v1205 = vld [vmem:[%s17 + $0x10] sm:$0xff]
    %v1206 = vld [vmem:[%s17 + $0x18] sm:$0xff]
    %v1207 = vld [vmem:[%s17 + $0x20] sm:$0xff]
    %v1208 = vld [vmem:[%s17 + $0x28] sm:$0xff]
    %v1209 = vld [vmem:[%s17 + $0x30] sm:$0xff]
    %v1210 = vld [vmem:[%s17 + $0x38] sm:$0xff]
    %v1211 = vld [vmem:[%s17 + $0x40] sm:$0xff]
    %v1212 = vld [vmem:[%s17 + $0x48] sm:$0xff]
    %v1213 = vld [vmem:[%s17 + $0x50] sm:$0xff]
    %v1214 = vld [vmem:[%s17 + $0x58] sm:$0xff]
    %v1215 = vld [vmem:[%s17 + $0x60] sm:$0xff]
    %v1216 = vld [vmem:[%s17 + $0x68] sm:$0xff]
    %v1217 = vld [vmem:[%s17 + $0x70] sm:$0xff]
    %v1218 = vld [vmem:[%s17 + $0x78] sm:$0xff]
    %v1219 = vld [vmem:[%s17 + $0x80] sm:$0xff]
    %v1220 = vld [vmem:[%s17 + $0x88] sm:$0xff]
    %v1221 = vld [vmem:[%s17 + $0x90] sm:$0xff]
    %v1222 = vld [vmem:[%s17 + $0x98] sm:$0xff]
    %v1223 = vld [vmem:[%s17 + $0xa0] sm:$0xff]
    %v1224 = vld [vmem:[%s17 + $0xa8] sm:$0xff]
    %v1225 = vld [vmem:[%s17 + $0xb0] sm:$0xff]
    %v1226 = vld [vmem:[%s17 + $0xb8] sm:$0xff]
    %v1227 = vld [vmem:[%s17 + $0xc0] sm:$0xff]
    %v1228 = vld [vmem:[%s17 + $0xc8] sm:$0xff]
    %v1229 = vld [vmem:[%s17 + $0xd0] sm:$0xff]
    %v1230 = vld [vmem:[%s17 + $0xd8] sm:$0xff]
    %v1231 = vld [vmem:[%s17 + $0xe0] sm:$0xff]
    %v1232 = vld [vmem:[%s17 + $0xe8] sm:$0xff]
    %v1233 = vld [vmem:[%s17 + $0xf0] sm:$0xff]
    %v1234 = vld [vmem:[%s17 + $0xf8] sm:$0xff]
    %1235 = vmatprep.subr.mxu0 0.0
    %1236 = vmatpush1.msra.mxu0 %v1203
    %1237 = vmatprep.subr.mxu0 0.0
    %1238 = vmatpush1.msra.mxu0 %v1204
    %1239 = vmatprep.subr.mxu0 0.0
    %1240 = vmatpush1.msra.mxu0 %v1205
    %1241 = vmatprep.subr.mxu0 0.0
    %1242 = vmatpush1.msra.mxu0 %v1206
    %1243 = vmatprep.subr.mxu0 0.0
    %1244 = vmatpush1.msra.mxu0 %v1207
    %1245 = vmatprep.subr.mxu0 0.0
    %1246 = vmatpush1.msra.mxu0 %v1208
    %1247 = vmatprep.subr.mxu0 0.0
    %1248 = vmatpush1.msra.mxu0 %v1209
    %1249 = vmatprep.subr.mxu0 0.0
    %1250 = vmatpush1.msra.mxu0 %v1210
    %1251 = vmatprep.subr.mxu0 0.0
    %1252 = vmatpush1.msra.mxu0 %v1211
    %1253 = vmatprep.subr.mxu0 0.0
    %1254 = vmatpush1.msra.mxu0 %v1212
    %1255 = vmatprep.subr.mxu0 0.0
    %1256 = vmatpush1.msra.mxu0 %v1213
    %1257 = vmatprep.subr.mxu0 0.0
    %1258 = vmatpush1.msra.mxu0 %v1214
    %1259 = vmatprep.subr.mxu0 0.0
    %1260 = vmatpush1.msra.mxu0 %v1215
    %1261 = vmatprep.subr.mxu0 0.0
    %1262 = vmatpush1.msra.mxu0 %v1216
    %1263 = vmatprep.subr.mxu0 0.0
    %1264 = vmatpush1.msra.mxu0 %v1217
    %1265 = vmatprep.subr.mxu0 0.0
    %1266 = vmatpush1.msra.mxu0 %v1218
    %1267 = vmatprep.subr.mxu0 0.0
    %1268 = vmatpush1.msra.mxu0 %v1219
    %1269 = vmatprep.subr.mxu0 0.0
    %1270 = vmatpush1.msra.mxu0 %v1220
    %1271 = vmatprep.subr.mxu0 0.0
    %1272 = vmatpush1.msra.mxu0 %v1221
    %1273 = vmatprep.subr.mxu0 0.0
    %1274 = vmatpush1.msra.mxu0 %v1222
    %1275 = vmatprep.subr.mxu0 0.0
    %1276 = vmatpush1.msra.mxu0 %v1223
    %1277 = vmatprep.subr.mxu0 0.0
    %1278 = vmatpush1.msra.mxu0 %v1224
    %1279 = vmatprep.subr.mxu0 0.0
    %1280 = vmatpush1.msra.mxu0 %v1225
    %1281 = vmatprep.subr.mxu0 0.0
    %1282 = vmatpush1.msra.mxu0 %v1226
    %1283 = vmatprep.subr.mxu0 0.0
    %1284 = vmatpush1.msra.mxu0 %v1227
    %1285 = vmatprep.subr.mxu0 0.0
    %1286 = vmatpush1.msra.mxu0 %v1228
    %1287 = vmatprep.subr.mxu0 0.0
    %1288 = vmatpush1.msra.mxu0 %v1229
    %1289 = vmatprep.subr.mxu0 0.0
    %1290 = vmatpush1.msra.mxu0 %v1230
    %1291 = vmatprep.subr.mxu0 0.0
    %1292 = vmatpush1.msra.mxu0 %v1231
    %1293 = vmatprep.subr.mxu0 0.0
    %1294 = vmatpush1.msra.mxu0 %v1232
    %1295 = vmatprep.subr.mxu0 0.0
    %1296 = vmatpush1.msra.mxu0 %v1233
    %1297 = vmatprep.subr.mxu0 0.0
    %1298 = vmatpush1.msra.mxu0 %v1234
    %1299 = vmatprep.mubr.f32.mxu0 %v1202
    %1300 = vmatmul.mubr.f32.gmra.mrb[0].mxu0 %v1201
    %v1301 = vpop.f32.mrb[0].mxu0
    %v1302 = vadd.f32 0.0, %v1301
    %v1303 = vpop.f32.mrb[0].mxu0
    %1304 = vdwg.mxu0
    %v1305 = vmul.f32 %v1302, 0.1
    %v1306 = vrcp.pop %v1305
    %v1307 = vld [vmem:[%s18] sm:$0xff]
    %v1309 = vcombine.high %v1307, %v1307
    %vm1310 = vcmask 31744
    %v1312 = vsel %vm1310, %v1306, 0
    %vm1314 = vcmask 1043456
    %v1315 = vsel %vm1314, %v1307, 0
    %v1317 = vsel %vm1314, %v1309, 0
    %1319 = vmatprep.subr.mxu0 %v1317
    %1320 = vmatpush1.msra.mxu0 %v1315
    %1321 = vmatprep.subr.mxu0 0.0
    %1322 = vmatpush1.msra.mxu0 0.0
    %1323 = vmatprep.subr.mxu0 0.0
    %1324 = vmatpush1.msra.mxu0 0.0
    %1325 = vmatprep.subr.mxu0 0.0
    %1326 = vmatpush1.msra.mxu0 0.0
    %1327 = vmatprep.subr.mxu0 0.0
    %1328 = vmatpush1.msra.mxu0 0.0
    %1329 = vmatprep.subr.mxu0 0.0
    %1330 = vmatpush1.msra.mxu0 0.0
    %1331 = vmatprep.subr.mxu0 0.0
    %1332 = vmatpush1.msra.mxu0 0.0
    %1333 = vmatprep.subr.mxu0 0.0
    %1334 = vmatpush1.msra.mxu0 0.0
    %1335 = vmatprep.subr.mxu0 0.0
    %1336 = vmatpush1.msra.mxu0 0.0
    %1337 = vmatprep.subr.mxu0 0.0
    %1338 = vmatpush1.msra.mxu0 0.0
    %1339 = vmatprep.subr.mxu0 0.0
    %1340 = vmatpush1.msra.mxu0 0.0
    %1341 = vmatprep.subr.mxu0 0.0
    %1342 = vmatpush1.msra.mxu0 0.0
    %1343 = vmatprep.subr.mxu0 0.0
    %1344 = vmatpush1.msra.mxu0 0.0
    %1345 = vmatprep.subr.mxu0 0.0
    %1346 = vmatpush1.msra.mxu0 0.0
    %1347 = vmatprep.subr.mxu0 0.0
    %1348 = vmatpush1.msra.mxu0 0.0
    %1349 = vmatprep.subr.mxu0 0.0
    %1350 = vmatpush1.msra.mxu0 0.0
    %1351 = vmatprep.subr.mxu0 0.0
    %1352 = vmatpush1.msra.mxu0 0.0
    %1353 = vmatprep.subr.mxu0 0.0
    %1354 = vmatpush1.msra.mxu0 0.0
    %1355 = vmatprep.subr.mxu0 0.0
    %1356 = vmatpush1.msra.mxu0 0.0
    %1357 = vmatprep.subr.mxu0 0.0
    %1358 = vmatpush1.msra.mxu0 0.0
    %1359 = vmatprep.subr.mxu0 0.0
    %1360 = vmatpush1.msra.mxu0 0.0
    %1361 = vmatprep.subr.mxu0 0.0
    %1362 = vmatpush1.msra.mxu0 0.0
    %1363 = vmatprep.subr.mxu0 0.0
    %1364 = vmatpush1.msra.mxu0 0.0
    %1365 = vmatprep.subr.mxu0 0.0
    %1366 = vmatpush1.msra.mxu0 0.0
    %1367 = vmatprep.subr.mxu0 0.0
    %1368 = vmatpush1.msra.mxu0 0.0
    %1369 = vmatprep.subr.mxu0 0.0
    %1370 = vmatpush1.msra.mxu0 0.0
    %1371 = vmatprep.subr.mxu0 0.0
    %1372 = vmatpush1.msra.mxu0 0.0
    %1373 = vmatprep.subr.mxu0 0.0
    %1374 = vmatpush1.msra.mxu0 0.0
    %1375 = vmatprep.subr.mxu0 0.0
    %1376 = vmatpush1.msra.mxu0 0.0
    %1377 = vmatprep.subr.mxu0 0.0
    %1378 = vmatpush1.msra.mxu0 0.0
    %1379 = vmatprep.subr.mxu0 0.0
    %1380 = vmatpush1.msra.mxu0 0.0
    %1381 = vmatprep.subr.mxu0 0.0
    %1382 = vmatpush1.msra.mxu0 0.0
    %1383 = vmatprep.mubr.f32.mxu0 0.0
    %1384 = vmatmul.mubr.f32.gmra.mrb[0].mxu0 %v1312
    %v1385 = vpop.f32.mrb[0].mxu0
    %v1386 = vadd.f32 0.0, %v1385
    %v1387 = vpop.f32.mrb[0].mxu0
    %v1388 = vadd.f32 0.0, %v1387
    %1389 = vdwg.mxu0
    %v1390 = vmul.f32 %v1201, %v1386
    %v1391 = vmul.f32 %v1202, %v1388
    %1392 = vst [vmem:[#allocation3] sm:$0xff] %v1390
    %1393 = vst [vmem:[#allocation3 + $0x8] sm:$0xff] %v1391
    %v1394 = vld [vmem:[%s19] sm:$0xff]
    %v1395 = vld [vmem:[%s19 + $0x8] sm:$0xff]
    %v1396 = vld [vmem:[%s19 + $0x10] sm:$0xff]
    %v1397 = vld [vmem:[%s19 + $0x18] sm:$0xff]
    %v1398 = vld [vmem:[%s19 + $0x20] sm:$0xff]
    %v1399 = vld [vmem:[%s19 + $0x28] sm:$0xff]
    %v1400 = vld [vmem:[%s19 + $0x30] sm:$0xff]
    %v1401 = vld [vmem:[%s19 + $0x38] sm:$0xff]
    %v1402 = vld [vmem:[%s19 + $0x40] sm:$0xff]
    %v1403 = vld [vmem:[%s19 + $0x48] sm:$0xff]
    %v1404 = vld [vmem:[%s19 + $0x50] sm:$0xff]
    %v1405 = vld [vmem:[%s19 + $0x58] sm:$0xff]
    %v1406 = vld [vmem:[%s19 + $0x60] sm:$0xff]
    %v1407 = vld [vmem:[%s19 + $0x68] sm:$0xff]
    %v1408 = vld [vmem:[%s19 + $0x70] sm:$0xff]
    %v1409 = vld [vmem:[%s19 + $0x78] sm:$0xff]
    %v1410 = vld [vmem:[%s19 + $0x80] sm:$0xff]
    %v1411 = vld [vmem:[%s19 + $0x88] sm:$0xff]
    %v1412 = vld [vmem:[%s19 + $0x90] sm:$0xff]
    %v1413 = vld [vmem:[%s19 + $0x98] sm:$0xff]
    %v1414 = vld [vmem:[%s19 + $0xa0] sm:$0xff]
    %v1415 = vld [vmem:[%s19 + $0xa8] sm:$0xff]
    %v1416 = vld [vmem:[%s19 + $0xb0] sm:$0xff]
    %v1417 = vld [vmem:[%s19 + $0xb8] sm:$0xff]
    %v1418 = vld [vmem:[%s19 + $0xc0] sm:$0xff]
    %v1419 = vld [vmem:[%s19 + $0xc8] sm:$0xff]
    %v1420 = vld [vmem:[%s19 + $0xd0] sm:$0xff]
    %v1421 = vld [vmem:[%s19 + $0xd8] sm:$0xff]
    %v1422 = vld [vmem:[%s19 + $0xe0] sm:$0xff]
    %v1423 = vld [vmem:[%s19 + $0xe8] sm:$0xff]
    %v1424 = vld [vmem:[%s19 + $0xf0] sm:$0xff]
    %v1425 = vld [vmem:[%s19 + $0xf8] sm:$0xff]
    %1426 = vmatprep.subr.mxu0 0.0
    %1427 = vmatpush1.msra.mxu0 %v1394
    %1428 = vmatprep.subr.mxu0 0.0
    %1429 = vmatpush1.msra.mxu0 %v1395
    %1430 = vmatprep.subr.mxu0 0.0
    %1431 = vmatpush1.msra.mxu0 %v1396
    %1432 = vmatprep.subr.mxu0 0.0
    %1433 = vmatpush1.msra.mxu0 %v1397
    %1434 = vmatprep.subr.mxu0 0.0
    %1435 = vmatpush1.msra.mxu0 %v1398
    %1436 = vmatprep.subr.mxu0 0.0
    %1437 = vmatpush1.msra.mxu0 %v1399
    %1438 = vmatprep.subr.mxu0 0.0
    %1439 = vmatpush1.msra.mxu0 %v1400
    %1440 = vmatprep.subr.mxu0 0.0
    %1441 = vmatpush1.msra.mxu0 %v1401
    %1442 = vmatprep.subr.mxu0 0.0
    %1443 = vmatpush1.msra.mxu0 %v1402
    %1444 = vmatprep.subr.mxu0 0.0
    %1445 = vmatpush1.msra.mxu0 %v1403
    %1446 = vmatprep.subr.mxu0 0.0
    %1447 = vmatpush1.msra.mxu0 %v1404
    %1448 = vmatprep.subr.mxu0 0.0
    %1449 = vmatpush1.msra.mxu0 %v1405
    %1450 = vmatprep.subr.mxu0 0.0
    %1451 = vmatpush1.msra.mxu0 %v1406
    %1452 = vmatprep.subr.mxu0 0.0
    %1453 = vmatpush1.msra.mxu0 %v1407
    %1454 = vmatprep.subr.mxu0 0.0
    %1455 = vmatpush1.msra.mxu0 %v1408
    %1456 = vmatprep.subr.mxu0 0.0
    %1457 = vmatpush1.msra.mxu0 %v1409
    %1458 = vmatprep.subr.mxu0 0.0
    %1459 = vmatpush1.msra.mxu0 %v1410
    %1460 = vmatprep.subr.mxu0 0.0
    %1461 = vmatpush1.msra.mxu0 %v1411
    %1462 = vmatprep.subr.mxu0 0.0
    %1463 = vmatpush1.msra.mxu0 %v1412
    %1464 = vmatprep.subr.mxu0 0.0
    %1465 = vmatpush1.msra.mxu0 %v1413
    %1466 = vmatprep.subr.mxu0 0.0
    %1467 = vmatpush1.msra.mxu0 %v1414
    %1468 = vmatprep.subr.mxu0 0.0
    %1469 = vmatpush1.msra.mxu0 %v1415
    %1470 = vmatprep.subr.mxu0 0.0
    %1471 = vmatpush1.msra.mxu0 %v1416
    %1472 = vmatprep.subr.mxu0 0.0
    %1473 = vmatpush1.msra.mxu0 %v1417
    %1474 = vmatprep.subr.mxu0 0.0
    %1475 = vmatpush1.msra.mxu0 %v1418
    %1476 = vmatprep.subr.mxu0 0.0
    %1477 = vmatpush1.msra.mxu0 %v1419
    %1478 = vmatprep.subr.mxu0 0.0
    %1479 = vmatpush1.msra.mxu0 %v1420
    %1480 = vmatprep.subr.mxu0 0.0
    %1481 = vmatpush1.msra.mxu0 %v1421
    %1482 = vmatprep.subr.mxu0 0.0
    %1483 = vmatpush1.msra.mxu0 %v1422
    %1484 = vmatprep.subr.mxu0 0.0
    %1485 = vmatpush1.msra.mxu0 %v1423
    %1486 = vmatprep.subr.mxu0 0.0
    %1487 = vmatpush1.msra.mxu0 %v1424
    %1488 = vmatprep.subr.mxu0 0.0
    %1489 = vmatpush1.msra.mxu0 %v1425
    %1490 = vmatprep.mubr.f32.mxu0 %v1391
    %1491 = vmatmul.mubr.f32.gmra.mrb[0].mxu0 %v1390
    %v1492 = vpop.f32.mrb[0].mxu0
    %v1493 = vadd.f32 0.0, %v1492
    %v1494 = vpop.f32.mrb[0].mxu0
    %1495 = vdwg.mxu0
    %v1496 = vmul.f32 %v1493, 0.001
    %v1497 = vld [vmem:[%s20] sm:$0x1]
    %v1499 = vlaneseq
    %v1500 = vshrl.u32 %v1499, 7
    %v1501 = vsub.s32 0, %v1500
    %v1502 = vrot.slane %v1497, %v1501
    %v1504 = vmul.f32 %v89, %v1502
    %1505 = vadd.xlane.f32.xlu0 %v1504
    %v1506 = vpop.xlane.xlu0 %1505
    %v1507 = vld [vmem:[#allocation2] sm:$0x1]
    %v1509 = vlaneseq
    %v1510 = vshrl.u32 %v1509, 7
    %v1511 = vsub.s32 0, %v1510
    %v1512 = vrot.slane %v1507, %v1511
    %v1514 = vadd.f32 %v1506, %v1512
    %v1515 = vadd.f32 %v1514, %v1496
    %vm1516 = vcmask 7168
    %1517 = vst.msk [vmem:[%s23] sm:$0xff] %vm1516, %v1515
    %1519 = vrot.lane.b32.xlu0 %v1496, 127
    %v1520 = vpop.permute.xlu0 %1519
    %1522 = vst.msk [vmem:[%s24] sm:$0xff] %vm1516, %v1520
    // Predicated region
    $region90: #{tpu_custom_call.1} parent=1 // pred_check
      _
    $region91: #{tpu_custom_call.1} parent=1 // pred_check_branch
      %1524 = sbr.rel (0) target = $region93
    $region92: #{tpu_custom_call.1} parent=1 // pred_region
      %s1526 = ssub.s32 256, 256
      %1527 = vsyncadd [#allocation4], %s1526
      %s1529 = sshll.u32 [#allocation3], 4
      %s1530 = int_to_ptr.vmem [resolvable:$true] %s1529
      %1532 = dma.vmem_to_hbm [thread:$0]  %s1530, 256, %s22, [#allocation4]
    $region93: #{tpu_custom_call.1} parent=1 // pred_fallthru
      _
    // Predicated region
    $region94: #{tpu_custom_call.1} parent=1 // pred_check
      _
    $region95: #{tpu_custom_call.1} parent=1 // pred_check_branch
      %1534 = sbr.rel (0) target = $region97
    $region96: #{tpu_custom_call.1} parent=1 // pred_region
      _
    $region97: #{tpu_custom_call.1} parent=1 // pred_fallthru
      _
    // Predicated region
    $region98: #{tpu_custom_call.1} parent=1 // pred_check
      _
    $region99: #{tpu_custom_call.1} parent=1 // pred_check_branch
      %1536 = sbr.rel (0) target = $region101
    $region100: #{tpu_custom_call.1} parent=1 // pred_region
      _
    $region101: #{tpu_custom_call.1} parent=1 // pred_fallthru
      _
    // Predicated region
    $region102: #{tpu_custom_call.1} parent=1 // pred_check
      _
    $region103: #{tpu_custom_call.1} parent=1 // pred_check_branch
      %1538 = sbr.rel (0) target = $region105
    $region104: #{tpu_custom_call.1} parent=1 // pred_region
      %1539 = dma.done [#allocation4], 256
    $region105: #{tpu_custom_call.1} parent=1 // pred_fallthru
      _
    // Predicated region
    $region106: #{tpu_custom_call.1} parent=1 // pred_check
      _
    $region107: #{tpu_custom_call.1} parent=1 // pred_check_branch
      %1541 = sbr.rel (0) target = $region109
    $region108: #{tpu_custom_call.1} parent=1 // pred_region
      _
    $region109: #{tpu_custom_call.1} parent=1 // pred_fallthru
      _
    // Predicated region
    $region110: #{tpu_custom_call.1} parent=1 // pred_check
      _
    $region111: #{tpu_custom_call.1} parent=1 // pred_check_branch
      %1543 = sbr.rel (0) target = $region113
    $region112: #{tpu_custom_call.1} parent=1 // pred_region
      _
    $region113: #{tpu_custom_call.1} parent=1 // pred_fallthru
      _
    %1544 = vsyncpa [#allocation4], 1

</llo_original>
